<compile_context>
chip_gen: v7x
topology: tpu7x:2x2x1
jax: 0.10.0
libtpu: 0.0.40
codegen_flags: <defaults>
</compile_context>

<pallas_src>
from functools import partial

import jax
import jax.numpy as jnp
from jax.experimental import pallas as pl
from jax.experimental.pallas import tpu as pltpu


# ----------------------------- fused Pallas kernel ------------------------------

def _fused_upsampling_kernel(
    x1_ref, x2_ref,                 # lane-dense activations (1, H1, W1*Cin), (1, H2, Lx2)
    wup_ref, ub_ref,                # merged transposed-conv weight / bias (up lanes only)
    w1_ref, s1_ref, t1_ref,         # conv1 fused banded weight (K = Lcat) + BN1 scale/shift
    w2_ref, s2_ref, t2_ref,         # conv2 banded weight + BN2 scale/shift
    o_ref,                          # (1, H2, Lout) lane-dense output
    catp, h1p,                      # VMEM scratch: row-padded concat buffer / conv1 output
    *, H1, H2, Lx2, Lcat,
):
    f32 = jnp.float32

    # --- ConvTranspose2d(k=2, s=2): ONE merged matmul (even+odd weights along N).
    # wup embeds the even-row result in lanes [Lx2:Lcat] of the first 128-lane half
    # and the odd-row result in lanes [Lcat+Lx2:2*Lcat] of the second half, i.e. both
    # halves already use the concat-buffer lane layout (x2 lanes are zero).
    y = jnp.dot(x1_ref[0], wup_ref[...], preferred_element_type=f32)        # (H1, 2*Lcat)

    # --- Row interleave WITHOUT per-row stores: stack the two (lane-aligned) halves
    # along sublanes and apply a tiny 0/1 permutation matmul (row r <- its source).
    stacked = jnp.concatenate([y[:, :Lcat], y[:, Lcat:]], axis=0)           # (H2, Lcat)
    r = jax.lax.broadcasted_iota(jnp.int32, (H2, H2), 0)
    s = jax.lax.broadcasted_iota(jnp.int32, (H2, H2), 1)
    two_s = s + s
    perm = jnp.logical_or(two_s == r, two_s + (1 - 2 * H1) == r).astype(f32)
    up_rows = jnp.dot(perm, stacked, preferred_element_type=f32)            # (H2, Lcat)

    # --- Embed x2 into lanes [0:Lx2] via a constant 0/1 matmul (avoids unaligned
    # lane concatenation) and add the transposed-conv bias (up lanes only).
    i2 = jax.lax.broadcasted_iota(jnp.int32, (Lx2, Lcat), 0)
    l2 = jax.lax.broadcasted_iota(jnp.int32, (Lx2, Lcat), 1)
    embed = (i2 == l2).astype(f32)                                          # (Lx2, Lcat)
    row_block = (jnp.dot(x2_ref[0], embed, preferred_element_type=f32)
                 + up_rows + ub_ref[...])                                   # (H2, Lcat)

    # --- Concat buffer [x2 | up] with a 1-row halo: single full-128-lane store;
    # only the two halo rows are zeroed (interior rows fully rewritten each step).
    catp[0:1, :] = jnp.zeros((1, Lcat), f32)
    catp[H2 + 1:H2 + 2, :] = jnp.zeros((1, Lcat), f32)
    catp[1:H2 + 1, :] = row_block

    # --- Conv1 (3x3, pad=1, no bias): 3 banded matmuls over the kh row shifts
    # (both concat branches fused into one K=Lcat matmul), fused eval-BN + ELU.
    acc = jnp.dot(catp[0:H2, :], w1_ref[0], preferred_element_type=f32)
    acc = acc + jnp.dot(catp[1:H2 + 1, :], w1_ref[1], preferred_element_type=f32)
    acc = acc + jnp.dot(catp[2:H2 + 2, :], w1_ref[2], preferred_element_type=f32)
    h1 = acc * s1_ref[...] + t1_ref[...]
    # TODO(synk): swap exp(x)-1 for jnp.expm1 once confirmed in the Mosaic lowering
    # set; as written it matches the reference exactly (abs err vs torch ELU ~1e-7).
    h1 = jnp.where(h1 > 0, h1, jnp.exp(h1) - 1.0)

    # --- Dropout(p=0.2) is identity in eval.  Conv2 (3x3, pad=1, no bias) + BN + ELU.
    h1p[0:1, :] = jnp.zeros((1, h1p.shape[1]), f32)
    h1p[H2 + 1:H2 + 2, :] = jnp.zeros((1, h1p.shape[1]), f32)
    h1p[1:H2 + 1, :] = h1
    acc2 = jnp.dot(h1p[0:H2, :], w2_ref[0], preferred_element_type=f32)
    acc2 = acc2 + jnp.dot(h1p[1:H2 + 1, :], w2_ref[1], preferred_element_type=f32)
    acc2 = acc2 + jnp.dot(h1p[2:H2 + 2, :], w2_ref[2], preferred_element_type=f32)
    h2 = acc2 * s2_ref[...] + t2_ref[...]
    h2 = jnp.where(h2 > 0, h2, jnp.exp(h2) - 1.0)

    o_ref[0] = h2                                       # unmasked full-lane store


# ----------------------------- weight pre-transforms -----------------------------

def _banded_conv_weights(w_hwio, width):
    """(3,3,Cin,Cout) conv weight -> per-kh banded (width*Cin, width*Cout) matrices.

    A lane-dense input row (width*Cin lanes) matmul'd with B[kh] yields that row's
    kw-summed contribution to every output column; padding=1 along W is encoded in
    the band structure (out-of-range taps are zeroed)."""
    kh_n, kw_n, cin, cout = w_hwio.shape
    jin = jnp.arange(width)[:, None]
    jout = jnp.arange(width)[None, :]
    kw = jin - jout + 1                                     # tap index for pad=1
    valid = ((kw >= 0) & (kw < kw_n)).astype(w_hwio.dtype)
    kw_c = jnp.clip(kw, 0, kw_n - 1)
    blk = w_hwio[:, kw_c, :, :] * valid[None, :, :, None, None]   # (3, W, W, Cin, Cout)
    return blk.transpose(0, 1, 3, 2, 4).reshape(kh_n, width * cin, width * cout)


def _bn_scale_shift(gamma, beta, mean, var, eps=1e-5):
    scale = gamma / jnp.sqrt(var + eps)
    shift = beta - mean * scale
    return scale, shift


# ------------------------------ forward wrapper ----------------------------------

def upsampling_layer_forward(x1_nchw, x2_nchw, params):
    f32 = jnp.float32
    N, Cin, H1, W1 = x1_nchw.shape
    _, Cx2, H2, W2 = x2_nchw.shape
    Cmid = params["up_w"].shape[1]                 # ConvTranspose out channels = Cin // 2
    Cout = params["conv1_w"].shape[-1]
    Lx2, Lup, Lout = W2 * Cx2, W2 * Cmid, W2 * Cout
    Lcat = Lx2 + Lup                               # 128-lane concat-buffer width here

    # Lane-dense activations (N, H, W*C): NCHW -> NHWC transpose + free row-major reshape.
    x1l = jnp.transpose(x1_nchw, (0, 2, 3, 1)).astype(f32).reshape(N, H1, W1 * Cin)
    x2l = jnp.transpose(x2_nchw, (0, 2, 3, 1)).astype(f32).reshape(N, H2, Lx2)

    # ConvTranspose2d(k=2,s=2) as ONE block-diagonal matmul: per input row, lanes
    # [Lx2:Lcat] of the first half hold the even output row and lanes [Lcat+Lx2:]
    # of the second half hold the odd output row (already in concat-buffer layout).
    # up_w: (Cin, Cmid, 2, 2) with dims (ci, co, kh, kw); output lane (2j+kw)*Cmid+co.
    up_w = params["up_w"].astype(f32)
    eye = jnp.eye(W1, dtype=f32)
    we = jnp.kron(eye, jnp.transpose(up_w[:, :, 0, :], (0, 2, 1)).reshape(Cin, 2 * Cmid))
    wo = jnp.kron(eye, jnp.transpose(up_w[:, :, 1, :], (0, 2, 1)).reshape(Cin, 2 * Cmid))
    zpad = jnp.zeros((W1 * Cin, Lx2), f32)
    wup = jnp.concatenate([zpad, we, zpad, wo], axis=1)            # (W1*Cin, 2*Lcat)
    ub = jnp.concatenate([jnp.zeros((Lx2,), f32),
                          jnp.tile(params["up_b"].astype(f32), W2)]).reshape(1, Lcat)

    # 3x3 convs as banded lane-dense matmuls; conv1 split over the concat channels
    # (cat([x2, up], C)) and re-fused along K so the kernel runs ONE matmul per kh.
    w1 = params["conv1_w"].astype(f32)
    w1a = _banded_conv_weights(w1[:, :, :Cx2, :], W2)              # (3, Lx2, Lout)
    w1b = _banded_conv_weights(w1[:, :, Cx2:, :], W2)              # (3, Lup, Lout)
    w1cat = jnp.concatenate([w1a, w1b], axis=1)                    # (3, Lcat, Lout)
    w2b = _banded_conv_weights(params["conv2_w"].astype(f32), W2)  # (3, Lout, Lout)

    s1, t1 = _bn_scale_shift(params["bn1_gamma"], params["bn1_beta"],
                             params["bn1_mean"], params["bn1_var"])
    s2, t2 = _bn_scale_shift(params["bn2_gamma"], params["bn2_beta"],
                             params["bn2_mean"], params["bn2_var"])
    s1t = jnp.tile(s1.astype(f32), W2).reshape(1, Lout)
    t1t = jnp.tile(t1.astype(f32), W2).reshape(1, Lout)
    s2t = jnp.tile(s2.astype(f32), W2).reshape(1, Lout)
    t2t = jnp.tile(t2.astype(f32), W2).reshape(1, Lout)

    kernel = partial(_fused_upsampling_kernel, H1=H1, H2=H2, Lx2=Lx2, Lcat=Lcat)

    out = pl.pallas_call(
        kernel,
        out_shape=jax.ShapeDtypeStruct((N, H2, Lout), f32),
        grid_spec=pltpu.PrefetchScalarGridSpec(
            num_scalar_prefetch=0,
            grid=(N,),
            in_specs=[
                pl.BlockSpec((1, H1, W1 * Cin), lambda n: (n, 0, 0)),     # x1 (lane-dense)
                pl.BlockSpec((1, H2, Lx2), lambda n: (n, 0, 0)),          # x2 (lane-dense)
                pl.BlockSpec((W1 * Cin, 2 * Lcat), lambda n: (0, 0)),     # merged up-conv weight
                pl.BlockSpec((1, Lcat), lambda n: (0, 0)),                # up-conv bias (up lanes)
                pl.BlockSpec((3, Lcat, Lout), lambda n: (0, 0, 0)),       # conv1 fused band
                pl.BlockSpec((1, Lout), lambda n: (0, 0)),                # bn1 scale
                pl.BlockSpec((1, Lout), lambda n: (0, 0)),                # bn1 shift
                pl.BlockSpec((3, Lout, Lout), lambda n: (0, 0, 0)),       # conv2 band
                pl.BlockSpec((1, Lout), lambda n: (0, 0)),                # bn2 scale
                pl.BlockSpec((1, Lout), lambda n: (0, 0)),                # bn2 shift
            ],
            out_specs=pl.BlockSpec((1, H2, Lout), lambda n: (n, 0, 0)),
            scratch_shapes=[
                pltpu.VMEM((H2 + 2, Lcat), f32),    # row-padded concat buffer [x2 | up]
                pltpu.VMEM((H2 + 2, Lout), f32),    # row-padded conv1 output
            ],
        ),
        compiler_params=pltpu.CompilerParams(
            dimension_semantics=("parallel",),      # batch axis -> v7x megacore
            vmem_limit_bytes=32 * 1024 * 1024,
        ),
    )(x1l, x2l, wup, ub, w1cat, s1t, t1t, w2b, s2t, t2t)

    return jnp.transpose(out.reshape(N, H2, W2, Cout), (0, 3, 1, 2))   # back to NCHW


# ------------------------------ pure-JAX reference --------------------------------

def _reference_forward(x1_nchw, x2_nchw, params):
    x1 = jnp.transpose(x1_nchw, (0, 2, 3, 1))
    x2 = jnp.transpose(x2_nchw, (0, 2, 3, 1))
    N, H, W, Cin = x1.shape
    Cmid = params["up_w"].shape[1]
    y = jnp.einsum("nhwc,cokl->nhwklo", x1, params["up_w"]) + params["up_b"]
    y = jnp.transpose(y, (0, 1, 3, 2, 4, 5)).reshape(N, 2 * H, 2 * W, Cmid)
    x = jnp.concatenate([x2, y], axis=-1)

    def conv3x3(x, w_hwio):
        xp = jnp.pad(x, ((0, 0), (1, 1), (1, 1), (0, 0)))
        n, h, w, _ = x.shape
        out = 0.0
        for kh in range(3):
            for kw in range(3):
                out = out + jnp.einsum("nhwc,cd->nhwd",
                                       xp[:, kh:kh + h, kw:kw + w, :],
                                       w_hwio[kh, kw])
        return out

    def bn_elu(x, g, b, m, v):
        s = g / jnp.sqrt(v + 1e-5)
        y = x * s + (b - m * s)
        return jnp.where(y > 0, y, jnp.exp(y) - 1.0)

    h = bn_elu(conv3x3(x, params["conv1_w"]), params["bn1_gamma"],
               params["bn1_beta"], params["bn1_mean"], params["bn1_var"])
    h = bn_elu(conv3x3(h, params["conv2_w"]), params["bn2_gamma"],
               params["bn2_beta"], params["bn2_mean"], params["bn2_var"])
    return jnp.transpose(h, (0, 3, 1, 2))


# ------------------------------------ main ----------------------------------------

if __name__ == "__main__":
    in_channels = 8
    out_channels = 8
    B, H1, W1 = 2, 8, 8            # x1 spatial (low-res)
    H2, W2 = 2 * H1, 2 * W1        # x2 spatial (high-res)

    key = jax.random.PRNGKey(0)
    keys = jax.random.split(key, 12)

    params = {
        # ConvTranspose2d(in_channels, in_channels//2, 2, 2): weight (Cin, Cout, 2, 2)
        "up_w": 0.1 * jax.random.normal(keys[0], (in_channels, in_channels // 2, 2, 2), jnp.float32),
        "up_b": 0.1 * jax.random.normal(keys[1], (in_channels // 2,), jnp.float32),
        # Conv2d(in_channels, out_channels, 3, bias=False): stored HWIO (3,3,Cin,Cout)
        "conv1_w": 0.1 * jax.random.normal(keys[2], (3, 3, in_channels, out_channels), jnp.float32),
        "bn1_gamma": 1.0 + 0.1 * jax.random.normal(keys[3], (out_channels,), jnp.float32),
        "bn1_beta": 0.1 * jax.random.normal(keys[4], (out_channels,), jnp.float32),
        "bn1_mean": 0.1 * jax.random.normal(keys[5], (out_channels,), jnp.float32),
        "bn1_var": 0.5 + jnp.abs(jax.random.normal(keys[6], (out_channels,), jnp.float32)),
        # Conv2d(out_channels, out_channels, 3, bias=False)
        "conv2_w": 0.1 * jax.random.normal(keys[7], (3, 3, out_channels, out_channels), jnp.float32),
        "bn2_gamma": 1.0 + 0.1 * jax.random.normal(keys[8], (out_channels,), jnp.float32),
        "bn2_beta": 0.1 * jax.random.normal(keys[9], (out_channels,), jnp.float32),
        "bn2_mean": 0.1 * jax.random.normal(keys[10], (out_channels,), jnp.float32),
        "bn2_var": 0.5 + jnp.abs(jax.random.normal(keys[11], (out_channels,), jnp.float32)),
    }

    kx1, kx2 = jax.random.split(jax.random.PRNGKey(42))
    x1 = jax.random.normal(kx1, (B, in_channels, H1, W1), jnp.float32)       # NCHW
    x2 = jax.random.normal(kx2, (B, in_channels // 2, H2, W2), jnp.float32)  # NCHW

    out = jax.jit(upsampling_layer_forward)(x1, x2, params)
    out = jax.block_until_ready(out)

    ref = _reference_forward(x1, x2, params)
    assert out.shape == (B, out_channels, H2, W2), out.shape
    assert jnp.allclose(out, ref, rtol=1e-4, atol=1e-4), float(jnp.max(jnp.abs(out - ref)))

    print("KERNEL_OK")
</pallas_src>

<mosaic_0001>
module attributes {stable_mosaic.version = 11 : i64} {
  func.func @_fused_upsampling_kernel(%arg0: i32, %arg1: memref<1x8x64xf32, #tpu.memory_space<vmem>>, %arg2: memref<1x16x64xf32, #tpu.memory_space<vmem>>, %arg3: memref<64x256xf32, #tpu.memory_space<vmem>>, %arg4: memref<1x128xf32, #tpu.memory_space<vmem>>, %arg5: memref<3x128x128xf32, #tpu.memory_space<vmem>>, %arg6: memref<1x128xf32, #tpu.memory_space<vmem>>, %arg7: memref<1x128xf32, #tpu.memory_space<vmem>>, %arg8: memref<3x128x128xf32, #tpu.memory_space<vmem>>, %arg9: memref<1x128xf32, #tpu.memory_space<vmem>>, %arg10: memref<1x128xf32, #tpu.memory_space<vmem>>, %arg11: memref<1x16x128xf32, #tpu.memory_space<vmem>>, %arg12: memref<18x128xf32, #tpu.memory_space<vmem>>, %arg13: memref<18x128xf32, #tpu.memory_space<vmem>>) attributes {dimension_semantics = [#tpu.dimension_semantics<parallel>], iteration_bounds = array<i64: 2>, scalar_prefetch = 0 : i64, scratch_operands = 2 : i64, tpu.core_type = #tpu.core_type<tc>, window_params = [{transform_indices = @transform_0, window_bounds = array<i64: 1, 8, 64>}, {transform_indices = @transform_1, window_bounds = array<i64: 1, 16, 64>}, {pipeline_mode = #tpu.pipeline_mode<synchronous>, transform_indices = @transform_2, window_bounds = array<i64: 64, 256>}, {pipeline_mode = #tpu.pipeline_mode<synchronous>, transform_indices = @transform_3, window_bounds = array<i64: 1, 128>}, {pipeline_mode = #tpu.pipeline_mode<synchronous>, transform_indices = @transform_4, window_bounds = array<i64: 3, 128, 128>}, {pipeline_mode = #tpu.pipeline_mode<synchronous>, transform_indices = @transform_5, window_bounds = array<i64: 1, 128>}, {pipeline_mode = #tpu.pipeline_mode<synchronous>, transform_indices = @transform_6, window_bounds = array<i64: 1, 128>}, {pipeline_mode = #tpu.pipeline_mode<synchronous>, transform_indices = @transform_7, window_bounds = array<i64: 3, 128, 128>}, {pipeline_mode = #tpu.pipeline_mode<synchronous>, transform_indices = @transform_8, window_bounds = array<i64: 1, 128>}, {pipeline_mode = #tpu.pipeline_mode<synchronous>, transform_indices = @transform_9, window_bounds = array<i64: 1, 128>}, {transform_indices = @transform_10, window_bounds = array<i64: 1, 16, 128>}]} {
    %c0 = arith.constant 0 : index
    %c0_0 = arith.constant 0 : index
    %c0_1 = arith.constant 0 : index
    %0 = vector.load %arg1[%c0, %c0_0, %c0_1] : memref<1x8x64xf32, #tpu.memory_space<vmem>>, vector<1x8x64xf32>
    %1 = vector.shape_cast %0 : vector<1x8x64xf32> to vector<8x64xf32>
    %c0_2 = arith.constant 0 : index
    %c0_3 = arith.constant 0 : index
    %2 = vector.load %arg3[%c0_2, %c0_3] : memref<64x256xf32, #tpu.memory_space<vmem>>, vector<64x256xf32>
    %cst = arith.constant dense<0.000000e+00> : vector<8x256xf32>
    %3 = tpu.matmul %1, %2, %cst {dimension_numbers = #tpu.dot_dimension_numbers<[1], [0], [0], [1], [0, 0, 1, 1], [], []>} : vector<8x64xf32>, vector<64x256xf32>, vector<8x256xf32> -> vector<8x256xf32>
    %4 = vector.extract_strided_slice %3 {offsets = [0, 0], sizes = [8, 128], strides = [1, 1]} : vector<8x256xf32> to vector<8x128xf32>
    %5 = vector.extract_strided_slice %3 {offsets = [0, 128], sizes = [8, 128], strides = [1, 1]} : vector<8x256xf32> to vector<8x128xf32>
    %6 = tpu.concatenate %4, %5 in 0 : vector<8x128xf32>, vector<8x128xf32> -> vector<16x128xf32>
    %7 = tpu.iota {dimensions = array<i32: 0>} : vector<16x16xi32>
    %8 = tpu.iota {dimensions = array<i32: 1>} : vector<16x16xi32>
    %9 = arith.addi %8, %8 : vector<16x16xi32>
    %10 = arith.cmpi eq, %9, %7 : vector<16x16xi32>
    %c-15_i32 = arith.constant -15 : i32
    %11 = vector.broadcast %c-15_i32 : i32 to vector<16x16xi32>
    %12 = arith.addi %9, %11 : vector<16x16xi32>
    %13 = arith.cmpi eq, %12, %7 : vector<16x16xi32>
    %14 = arith.ori %10, %13 : vector<16x16xi1>
    %15 = arith.extui %14 : vector<16x16xi1> to vector<16x16xi32>
    %16 = arith.sitofp %15 : vector<16x16xi32> to vector<16x16xf32>
    %cst_4 = arith.constant dense<0.000000e+00> : vector<16x128xf32>
    %17 = tpu.matmul %16, %6, %cst_4 {dimension_numbers = #tpu.dot_dimension_numbers<[1], [0], [0], [1], [0, 0, 1, 1], [], []>} : vector<16x16xf32>, vector<16x128xf32>, vector<16x128xf32> -> vector<16x128xf32>
    %18 = tpu.iota {dimensions = array<i32: 0>} : vector<64x128xi32>
    %19 = tpu.iota {dimensions = array<i32: 1>} : vector<64x128xi32>
    %20 = arith.cmpi eq, %18, %19 : vector<64x128xi32>
    %21 = arith.extui %20 : vector<64x128xi1> to vector<64x128xi32>
    %22 = arith.sitofp %21 : vector<64x128xi32> to vector<64x128xf32>
    %c0_5 = arith.constant 0 : index
    %c0_6 = arith.constant 0 : index
    %c0_7 = arith.constant 0 : index
    %23 = vector.load %arg2[%c0_5, %c0_6, %c0_7] : memref<1x16x64xf32, #tpu.memory_space<vmem>>, vector<1x16x64xf32>
    %24 = vector.shape_cast %23 : vector<1x16x64xf32> to vector<16x64xf32>
    %cst_8 = arith.constant dense<0.000000e+00> : vector<16x128xf32>
    %25 = tpu.matmul %24, %22, %cst_8 {dimension_numbers = #tpu.dot_dimension_numbers<[1], [0], [0], [1], [0, 0, 1, 1], [], []>} : vector<16x64xf32>, vector<64x128xf32>, vector<16x128xf32> -> vector<16x128xf32>
    %26 = arith.addf %25, %17 : vector<16x128xf32>
    %c0_9 = arith.constant 0 : index
    %c0_10 = arith.constant 0 : index
    %27 = vector.load %arg4[%c0_9, %c0_10] : memref<1x128xf32, #tpu.memory_space<vmem>>, vector<1x128xf32>
    %28 = vector.broadcast %27 : vector<1x128xf32> to vector<16x128xf32>
    %29 = arith.addf %26, %28 : vector<16x128xf32>
    %cst_11 = arith.constant 0.000000e+00 : f32
    %30 = vector.broadcast %cst_11 : f32 to vector<1x128xf32>
    %c0_12 = arith.constant 0 : index
    %c0_13 = arith.constant 0 : index
    %31 = vector.load %arg12[%c0_12, %c0_13] : memref<18x128xf32, #tpu.memory_space<vmem>>, vector<1x128xf32>
    tpu.vector_store %arg12[%c0_12, %c0_13], %30 {strides = array<i32>} : memref<18x128xf32, #tpu.memory_space<vmem>>, vector<1x128xf32>,
    %cst_14 = arith.constant 0.000000e+00 : f32
    %32 = vector.broadcast %cst_14 : f32 to vector<1x128xf32>
    %c17 = arith.constant 17 : index
    %c0_15 = arith.constant 0 : index
    %33 = vector.load %arg12[%c17, %c0_15] : memref<18x128xf32, #tpu.memory_space<vmem>>, vector<1x128xf32>
    tpu.vector_store %arg12[%c17, %c0_15], %32 {strides = array<i32>} : memref<18x128xf32, #tpu.memory_space<vmem>>, vector<1x128xf32>,
    %c1 = arith.constant 1 : index
    %c0_16 = arith.constant 0 : index
    %34 = vector.load %arg12[%c1, %c0_16] : memref<18x128xf32, #tpu.memory_space<vmem>>, vector<16x128xf32>
    tpu.vector_store %arg12[%c1, %c0_16], %29 {strides = array<i32>} : memref<18x128xf32, #tpu.memory_space<vmem>>, vector<16x128xf32>,
    %c0_17 = arith.constant 0 : index
    %c0_18 = arith.constant 0 : index
    %35 = vector.load %arg12[%c0_17, %c0_18] : memref<18x128xf32, #tpu.memory_space<vmem>>, vector<16x128xf32>
    %c0_19 = arith.constant 0 : index
    %c0_20 = arith.constant 0 : index
    %c0_21 = arith.constant 0 : index
    %36 = vector.load %arg5[%c0_19, %c0_20, %c0_21] : memref<3x128x128xf32, #tpu.memory_space<vmem>>, vector<1x128x128xf32>
    %37 = vector.shape_cast %36 : vector<1x128x128xf32> to vector<128x128xf32>
    %cst_22 = arith.constant dense<0.000000e+00> : vector<16x128xf32>
    %38 = tpu.matmul %35, %37, %cst_22 {dimension_numbers = #tpu.dot_dimension_numbers<[1], [0], [0], [1], [0, 0, 1, 1], [], []>} : vector<16x128xf32>, vector<128x128xf32>, vector<16x128xf32> -> vector<16x128xf32>
    %c1_23 = arith.constant 1 : index
    %c0_24 = arith.constant 0 : index
    %39 = vector.load %arg12[%c1_23, %c0_24] : memref<18x128xf32, #tpu.memory_space<vmem>>, vector<16x128xf32>
    %c1_25 = arith.constant 1 : index
    %c0_26 = arith.constant 0 : index
    %c0_27 = arith.constant 0 : index
    %40 = vector.load %arg5[%c1_25, %c0_26, %c0_27] : memref<3x128x128xf32, #tpu.memory_space<vmem>>, vector<1x128x128xf32>
    %41 = vector.shape_cast %40 : vector<1x128x128xf32> to vector<128x128xf32>
    %cst_28 = arith.constant dense<0.000000e+00> : vector<16x128xf32>
    %42 = tpu.matmul %39, %41, %cst_28 {dimension_numbers = #tpu.dot_dimension_numbers<[1], [0], [0], [1], [0, 0, 1, 1], [], []>} : vector<16x128xf32>, vector<128x128xf32>, vector<16x128xf32> -> vector<16x128xf32>
    %43 = arith.addf %38, %42 : vector<16x128xf32>
    %c2 = arith.constant 2 : index
    %c0_29 = arith.constant 0 : index
    %44 = vector.load %arg12[%c2, %c0_29] : memref<18x128xf32, #tpu.memory_space<vmem>>, vector<16x128xf32>
    %c2_30 = arith.constant 2 : index
    %c0_31 = arith.constant 0 : index
    %c0_32 = arith.constant 0 : index
    %45 = vector.load %arg5[%c2_30, %c0_31, %c0_32] : memref<3x128x128xf32, #tpu.memory_space<vmem>>, vector<1x128x128xf32>
    %46 = vector.shape_cast %45 : vector<1x128x128xf32> to vector<128x128xf32>
    %cst_33 = arith.constant dense<0.000000e+00> : vector<16x128xf32>
    %47 = tpu.matmul %44, %46, %cst_33 {dimension_numbers = #tpu.dot_dimension_numbers<[1], [0], [0], [1], [0, 0, 1, 1], [], []>} : vector<16x128xf32>, vector<128x128xf32>, vector<16x128xf32> -> vector<16x128xf32>
    %48 = arith.addf %43, %47 : vector<16x128xf32>
    %c0_34 = arith.constant 0 : index
    %c0_35 = arith.constant 0 : index
    %49 = vector.load %arg6[%c0_34, %c0_35] : memref<1x128xf32, #tpu.memory_space<vmem>>, vector<1x128xf32>
    %50 = vector.broadcast %49 : vector<1x128xf32> to vector<16x128xf32>
    %51 = arith.mulf %48, %50 : vector<16x128xf32>
    %c0_36 = arith.constant 0 : index
    %c0_37 = arith.constant 0 : index
    %52 = vector.load %arg7[%c0_36, %c0_37] : memref<1x128xf32, #tpu.memory_space<vmem>>, vector<1x128xf32>
    %53 = vector.broadcast %52 : vector<1x128xf32> to vector<16x128xf32>
    %54 = arith.addf %51, %53 : vector<16x128xf32>
    %cst_38 = arith.constant 0.000000e+00 : f32
    %55 = vector.broadcast %cst_38 : f32 to vector<16x128xf32>
    %56 = arith.cmpf ogt, %54, %55 : vector<16x128xf32>
    %57 = math.exp %54 : vector<16x128xf32>
    %cst_39 = arith.constant 1.000000e+00 : f32
    %58 = vector.broadcast %cst_39 : f32 to vector<16x128xf32>
    %59 = arith.subf %57, %58 : vector<16x128xf32>
    %60 = arith.select %56, %54, %59 : vector<16x128xi1>, vector<16x128xf32>
    %cst_40 = arith.constant 0.000000e+00 : f32
    %61 = vector.broadcast %cst_40 : f32 to vector<1x128xf32>
    %c0_41 = arith.constant 0 : index
    %c0_42 = arith.constant 0 : index
    %62 = vector.load %arg13[%c0_41, %c0_42] : memref<18x128xf32, #tpu.memory_space<vmem>>, vector<1x128xf32>
    tpu.vector_store %arg13[%c0_41, %c0_42], %61 {strides = array<i32>} : memref<18x128xf32, #tpu.memory_space<vmem>>, vector<1x128xf32>,
    %cst_43 = arith.constant 0.000000e+00 : f32
    %63 = vector.broadcast %cst_43 : f32 to vector<1x128xf32>
    %c17_44 = arith.constant 17 : index
    %c0_45 = arith.constant 0 : index
    %64 = vector.load %arg13[%c17_44, %c0_45] : memref<18x128xf32, #tpu.memory_space<vmem>>, vector<1x128xf32>
    tpu.vector_store %arg13[%c17_44, %c0_45], %63 {strides = array<i32>} : memref<18x128xf32, #tpu.memory_space<vmem>>, vector<1x128xf32>,
    %c1_46 = arith.constant 1 : index
    %c0_47 = arith.constant 0 : index
    %65 = vector.load %arg13[%c1_46, %c0_47] : memref<18x128xf32, #tpu.memory_space<vmem>>, vector<16x128xf32>
    tpu.vector_store %arg13[%c1_46, %c0_47], %60 {strides = array<i32>} : memref<18x128xf32, #tpu.memory_space<vmem>>, vector<16x128xf32>,
    %c0_48 = arith.constant 0 : index
    %c0_49 = arith.constant 0 : index
    %66 = vector.load %arg13[%c0_48, %c0_49] : memref<18x128xf32, #tpu.memory_space<vmem>>, vector<16x128xf32>
    %c0_50 = arith.constant 0 : index
    %c0_51 = arith.constant 0 : index
    %c0_52 = arith.constant 0 : index
    %67 = vector.load %arg8[%c0_50, %c0_51, %c0_52] : memref<3x128x128xf32, #tpu.memory_space<vmem>>, vector<1x128x128xf32>
    %68 = vector.shape_cast %67 : vector<1x128x128xf32> to vector<128x128xf32>
    %cst_53 = arith.constant dense<0.000000e+00> : vector<16x128xf32>
    %69 = tpu.matmul %66, %68, %cst_53 {dimension_numbers = #tpu.dot_dimension_numbers<[1], [0], [0], [1], [0, 0, 1, 1], [], []>} : vector<16x128xf32>, vector<128x128xf32>, vector<16x128xf32> -> vector<16x128xf32>
    %c1_54 = arith.constant 1 : index
    %c0_55 = arith.constant 0 : index
    %70 = vector.load %arg13[%c1_54, %c0_55] : memref<18x128xf32, #tpu.memory_space<vmem>>, vector<16x128xf32>
    %c1_56 = arith.constant 1 : index
    %c0_57 = arith.constant 0 : index
    %c0_58 = arith.constant 0 : index
    %71 = vector.load %arg8[%c1_56, %c0_57, %c0_58] : memref<3x128x128xf32, #tpu.memory_space<vmem>>, vector<1x128x128xf32>
    %72 = vector.shape_cast %71 : vector<1x128x128xf32> to vector<128x128xf32>
    %cst_59 = arith.constant dense<0.000000e+00> : vector<16x128xf32>
    %73 = tpu.matmul %70, %72, %cst_59 {dimension_numbers = #tpu.dot_dimension_numbers<[1], [0], [0], [1], [0, 0, 1, 1], [], []>} : vector<16x128xf32>, vector<128x128xf32>, vector<16x128xf32> -> vector<16x128xf32>
    %74 = arith.addf %69, %73 : vector<16x128xf32>
    %c2_60 = arith.constant 2 : index
    %c0_61 = arith.constant 0 : index
    %75 = vector.load %arg13[%c2_60, %c0_61] : memref<18x128xf32, #tpu.memory_space<vmem>>, vector<16x128xf32>
    %c2_62 = arith.constant 2 : index
    %c0_63 = arith.constant 0 : index
    %c0_64 = arith.constant 0 : index
    %76 = vector.load %arg8[%c2_62, %c0_63, %c0_64] : memref<3x128x128xf32, #tpu.memory_space<vmem>>, vector<1x128x128xf32>
    %77 = vector.shape_cast %76 : vector<1x128x128xf32> to vector<128x128xf32>
    %cst_65 = arith.constant dense<0.000000e+00> : vector<16x128xf32>
    %78 = tpu.matmul %75, %77, %cst_65 {dimension_numbers = #tpu.dot_dimension_numbers<[1], [0], [0], [1], [0, 0, 1, 1], [], []>} : vector<16x128xf32>, vector<128x128xf32>, vector<16x128xf32> -> vector<16x128xf32>
    %79 = arith.addf %74, %78 : vector<16x128xf32>
    %c0_66 = arith.constant 0 : index
    %c0_67 = arith.constant 0 : index
    %80 = vector.load %arg9[%c0_66, %c0_67] : memref<1x128xf32, #tpu.memory_space<vmem>>, vector<1x128xf32>
    %81 = vector.broadcast %80 : vector<1x128xf32> to vector<16x128xf32>
    %82 = arith.mulf %79, %81 : vector<16x128xf32>
    %c0_68 = arith.constant 0 : index
    %c0_69 = arith.constant 0 : index
    %83 = vector.load %arg10[%c0_68, %c0_69] : memref<1x128xf32, #tpu.memory_space<vmem>>, vector<1x128xf32>
    %84 = vector.broadcast %83 : vector<1x128xf32> to vector<16x128xf32>
    %85 = arith.addf %82, %84 : vector<16x128xf32>
    %cst_70 = arith.constant 0.000000e+00 : f32
    %86 = vector.broadcast %cst_70 : f32 to vector<16x128xf32>
    %87 = arith.cmpf ogt, %85, %86 : vector<16x128xf32>
    %88 = math.exp %85 : vector<16x128xf32>
    %cst_71 = arith.constant 1.000000e+00 : f32
    %89 = vector.broadcast %cst_71 : f32 to vector<16x128xf32>
    %90 = arith.subf %88, %89 : vector<16x128xf32>
    %91 = arith.select %87, %85, %90 : vector<16x128xi1>, vector<16x128xf32>
    %c0_72 = arith.constant 0 : index
    %c0_73 = arith.constant 0 : index
    %c0_74 = arith.constant 0 : index
    %92 = vector.load %arg11[%c0_72, %c0_73, %c0_74] : memref<1x16x128xf32, #tpu.memory_space<vmem>>, vector<1x16x128xf32>
    %93 = vector.shape_cast %92 : vector<1x16x128xf32> to vector<16x128xf32>
    %94 = vector.shape_cast %91 : vector<16x128xf32> to vector<1x16x128xf32>
    tpu.vector_store %arg11[%c0_72, %c0_73, %c0_74], %94 {strides = array<i32>} : memref<1x16x128xf32, #tpu.memory_space<vmem>>, vector<1x16x128xf32>,
    return
  }
  func.func @transform_0(%arg0: i32) -> (i32, i32, i32) {
    %c0_i32 = arith.constant 0 : i32
    %c0_i32_0 = arith.constant 0 : i32
    %c0_i32_1 = arith.constant 0 : i32
    return %arg0, %c0_i32, %c0_i32_0 : i32, i32, i32
  }
  func.func @transform_1(%arg0: i32) -> (i32, i32, i32) {
    %c0_i32 = arith.constant 0 : i32
    %c0_i32_0 = arith.constant 0 : i32
    %c0_i32_1 = arith.constant 0 : i32
    return %arg0, %c0_i32, %c0_i32_0 : i32, i32, i32
  }
  func.func @transform_2(%arg0: i32) -> (i32, i32) {
    %c0_i32 = arith.constant 0 : i32
    %c0_i32_0 = arith.constant 0 : i32
    %c0_i32_1 = arith.constant 0 : i32
    return %c0_i32, %c0_i32_0 : i32, i32
  }
  func.func @transform_3(%arg0: i32) -> (i32, i32) {
    %c0_i32 = arith.constant 0 : i32
    %c0_i32_0 = arith.constant 0 : i32
    %c0_i32_1 = arith.constant 0 : i32
    return %c0_i32, %c0_i32_0 : i32, i32
  }
  func.func @transform_4(%arg0: i32) -> (i32, i32, i32) {
    %c0_i32 = arith.constant 0 : i32
    %c0_i32_0 = arith.constant 0 : i32
    %c0_i32_1 = arith.constant 0 : i32
    %c0_i32_2 = arith.constant 0 : i32
    return %c0_i32, %c0_i32_0, %c0_i32_1 : i32, i32, i32
  }
  func.func @transform_5(%arg0: i32) -> (i32, i32) {
    %c0_i32 = arith.constant 0 : i32
    %c0_i32_0 = arith.constant 0 : i32
    %c0_i32_1 = arith.constant 0 : i32
    return %c0_i32, %c0_i32_0 : i32, i32
  }
  func.func @transform_6(%arg0: i32) -> (i32, i32) {
    %c0_i32 = arith.constant 0 : i32
    %c0_i32_0 = arith.constant 0 : i32
    %c0_i32_1 = arith.constant 0 : i32
    return %c0_i32, %c0_i32_0 : i32, i32
  }
  func.func @transform_7(%arg0: i32) -> (i32, i32, i32) {
    %c0_i32 = arith.constant 0 : i32
    %c0_i32_0 = arith.constant 0 : i32
    %c0_i32_1 = arith.constant 0 : i32
    %c0_i32_2 = arith.constant 0 : i32
    return %c0_i32, %c0_i32_0, %c0_i32_1 : i32, i32, i32
  }
  func.func @transform_8(%arg0: i32) -> (i32, i32) {
    %c0_i32 = arith.constant 0 : i32
    %c0_i32_0 = arith.constant 0 : i32
    %c0_i32_1 = arith.constant 0 : i32
    return %c0_i32, %c0_i32_0 : i32, i32
  }
  func.func @transform_9(%arg0: i32) -> (i32, i32) {
    %c0_i32 = arith.constant 0 : i32
    %c0_i32_0 = arith.constant 0 : i32
    %c0_i32_1 = arith.constant 0 : i32
    return %c0_i32, %c0_i32_0 : i32, i32
  }
  func.func @transform_10(%arg0: i32) -> (i32, i32, i32) {
    %c0_i32 = arith.constant 0 : i32
    %c0_i32_0 = arith.constant 0 : i32
    %c0_i32_1 = arith.constant 0 : i32
    return %arg0, %c0_i32, %c0_i32_0 : i32, i32, i32
  }
}

</mosaic_0001>

<llo_original>
// kernel: tile.33
$region0: #{tile.33}
  #allocation0 [shape = 's32[1]{0}', space=sflag, size = 0x4, scoped, tag = 'scoped memory for tile.33']
  %s0 = inlined_call_operand.vmem [shape: f32[8], index: 0, kind: input, shape index: {}]
  %s1 = inlined_call_operand.vmem [shape: f32[16,8], index: 1, kind: output, shape index: {}]
  // Predicated region
  $region2: #{tile.33} parent=0 // pred_check
    _
  $region3: #{tile.33} parent=0 // pred_check_branch
    %3 = sbr.rel (0) target = $region5
  $region4: #{tile.33} parent=0 // pred_region
    _
  $region5: #{tile.33} parent=0 // pred_fallthru
    _
  %v4 = vld [vmem:[%s0] ss:$0 sm:$0xff]
  %5 = vst [vmem:[%s1] sm:$0xff] %v4
  %s6 = scalar_lea.vmem %s1, 8
  %7 = vst [vmem:[%s6] sm:$0xff] %v4

// kernel: tile.34
$region0: #{tile.34}
  %s0 = inlined_call_operand.vmem [shape: f32[16,8], index: 0, kind: input, shape index: {}]
  %s1 = inlined_call_operand.vmem [shape: f32[1,128], index: 1, kind: output, shape index: {}]
  $region1: #{tile.34} parent=0
    #allocation0 [shape = 'u8[4096]{0}', space=vmem, size = 0x1000, scoped, tag = 'scoped mem for output reshape']
    %v2 = vld [vmem:[%s0] sm:$0x1]
    %vm3 = vcmask 64512
    %4 = vst.msk [vmem:[#allocation0] sm:$0x1] %vm3, %v2
    %s5 = scalar_lea.vmem %s0, 15
    %v6 = vld [vmem:[%s5] sm:$0x1]
    %7 = vrot.lane.b32.xlu0 %v6, 120
    %v8 = vpop.permute.xlu0 %7
    %vm9 = vcmask 1048512
    %10 = vst.msk [vmem:[#allocation0] sm:$0x1] %vm9, %v8
    %s11 = scalar_lea.vmem %s0, 14
    %v12 = vld [vmem:[%s11] sm:$0x1]
    %13 = vrot.lane.b32.xlu0 %v12, 112
    %v14 = vpop.permute.xlu0 %13
    %vm15 = vcmask 982912
    %16 = vst.msk [vmem:[#allocation0] sm:$0x1] %vm15, %v14
    %s17 = scalar_lea.vmem %s0, 13
    %v18 = vld [vmem:[%s17] sm:$0x1]
    %19 = vrot.lane.b32.xlu0 %v18, 104
    %v20 = vpop.permute.xlu0 %19
    %vm21 = vcmask 917312
    %22 = vst.msk [vmem:[#allocation0] sm:$0x1] %vm21, %v20
    %s23 = scalar_lea.vmem %s0, 12
    %v24 = vld [vmem:[%s23] sm:$0x1]
    %25 = vrot.lane.b32.xlu0 %v24, 96
    %v26 = vpop.permute.xlu0 %25
    %vm27 = vcmask 851712
    %28 = vst.msk [vmem:[#allocation0] sm:$0x1] %vm27, %v26
    %s29 = scalar_lea.vmem %s0, 11
    %v30 = vld [vmem:[%s29] sm:$0x1]
    %31 = vrot.lane.b32.xlu0 %v30, 88
    %v32 = vpop.permute.xlu0 %31
    %vm33 = vcmask 786112
    %34 = vst.msk [vmem:[#allocation0] sm:$0x1] %vm33, %v32
    %s35 = scalar_lea.vmem %s0, 10
    %v36 = vld [vmem:[%s35] sm:$0x1]
    %37 = vrot.lane.b32.xlu0 %v36, 80
    %v38 = vpop.permute.xlu0 %37
    %vm39 = vcmask 720512
    %40 = vst.msk [vmem:[#allocation0] sm:$0x1] %vm39, %v38
    %s41 = scalar_lea.vmem %s0, 9
    %v42 = vld [vmem:[%s41] sm:$0x1]
    %43 = vrot.lane.b32.xlu0 %v42, 72
    %v44 = vpop.permute.xlu0 %43
    %vm45 = vcmask 654912
    %46 = vst.msk [vmem:[#allocation0] sm:$0x1] %vm45, %v44
    %s47 = scalar_lea.vmem %s0, 8
    %v48 = vld [vmem:[%s47] sm:$0x1]
    %49 = vrot.lane.b32.xlu0 %v48, 64
    %v50 = vpop.permute.xlu0 %49
    %vm51 = vcmask 589312
    %52 = vst.msk [vmem:[#allocation0] sm:$0x1] %vm51, %v50
    %s53 = scalar_lea.vmem %s0, 7
    %v54 = vld [vmem:[%s53] sm:$0x1]
    %55 = vrot.lane.b32.xlu0 %v54, 56
    %v56 = vpop.permute.xlu0 %55
    %vm57 = vcmask 523712
    %58 = vst.msk [vmem:[#allocation0] sm:$0x1] %vm57, %v56
    %s59 = scalar_lea.vmem %s0, 6
    %v60 = vld [vmem:[%s59] sm:$0x1]
    %61 = vrot.lane.b32.xlu0 %v60, 48
    %v62 = vpop.permute.xlu0 %61
    %vm63 = vcmask 458112
    %64 = vst.msk [vmem:[#allocation0] sm:$0x1] %vm63, %v62
    %s65 = scalar_lea.vmem %s0, 5
    %v66 = vld [vmem:[%s65] sm:$0x1]
    %67 = vrot.lane.b32.xlu0 %v66, 40
    %v68 = vpop.permute.xlu0 %67
    %vm69 = vcmask 392512
    %70 = vst.msk [vmem:[#allocation0] sm:$0x1] %vm69, %v68
    %s71 = scalar_lea.vmem %s0, 4
    %v72 = vld [vmem:[%s71] sm:$0x1]
    %73 = vrot.lane.b32.xlu0 %v72, 32
    %v74 = vpop.permute.xlu0 %73
    %vm75 = vcmask 326912
    %76 = vst.msk [vmem:[#allocation0] sm:$0x1] %vm75, %v74
    %s77 = scalar_lea.vmem %s0, 3
    %v78 = vld [vmem:[%s77] sm:$0x1]
    %79 = vrot.lane.b32.xlu0 %v78, 24
    %v80 = vpop.permute.xlu0 %79
    %vm81 = vcmask 261312
    %82 = vst.msk [vmem:[#allocation0] sm:$0x1] %vm81, %v80
    %s83 = scalar_lea.vmem %s0, 2
    %v84 = vld [vmem:[%s83] sm:$0x1]
    %85 = vrot.lane.b32.xlu0 %v84, 16
    %v86 = vpop.permute.xlu0 %85
    %vm87 = vcmask 195712
    %88 = vst.msk [vmem:[#allocation0] sm:$0x1] %vm87, %v86
    %s89 = scalar_lea.vmem %s0, 1
    %v90 = vld [vmem:[%s89] sm:$0x1]
    %91 = vrot.lane.b32.xlu0 %v90, 8
    %v92 = vpop.permute.xlu0 %91
    %vm93 = vcmask 130112
    %94 = vst.msk [vmem:[#allocation0] sm:$0x1] %vm93, %v92
    %s96 = sshllo.u32 0, 1
    %v98 = vld [vmem:[#allocation0] sm:%s96]
    %s99 = sshllo.u32 0, 1
    %100 = vst [vmem:[%s1] sm:%s99] %v98

// kernel: tile.28
$region0: #{tile.28}
  #allocation0 [shape = 's32[1]{0}', space=sflag, size = 0x4, scoped, tag = 'scoped memory for tile.28']
  %s0 = inlined_call_operand.vmem [shape: f32[4], index: 0, kind: input, shape index: {}]
  %s1 = inlined_call_operand.vmem [shape: f32[16,4], index: 1, kind: output, shape index: {}]
  // Predicated region
  $region2: #{tile.28} parent=0 // pred_check
    _
  $region3: #{tile.28} parent=0 // pred_check_branch
    %3 = sbr.rel (0) target = $region5
  $region4: #{tile.28} parent=0 // pred_region
    _
  $region5: #{tile.28} parent=0 // pred_fallthru
    _
  %v4 = vld [vmem:[%s0] ss:$0 sm:$0xff]
  %5 = vst [vmem:[%s1] sm:$0xff] %v4
  %s6 = scalar_lea.vmem %s1, 8
  %7 = vst [vmem:[%s6] sm:$0xff] %v4

// kernel: tile.29
$region0: #{tile.29}
  %s0 = inlined_call_operand.vmem [shape: f32[16,4], index: 0, kind: input, shape index: {}]
  %s1 = inlined_call_operand.vmem [shape: f32[64], index: 1, kind: output, shape index: {}]
  $region1: #{tile.29} parent=0
    #allocation0 [shape = 'u8[4096]{0}', space=vmem, size = 0x1000, scoped, tag = 'scoped mem for output reshape']
    %v2 = vld [vmem:[%s0] sm:$0x1]
    %vm3 = vcmask 31744
    %4 = vst.msk [vmem:[#allocation0] sm:$0x1] %vm3, %v2
    %s5 = scalar_lea.vmem %s0, 15
    %v6 = vld [vmem:[%s5] sm:$0x1]
    %7 = vrot.lane.b32.xlu0 %v6, 60
    %v8 = vpop.permute.xlu0 %7
    %vm9 = vcmask 523744
    %10 = vst.msk [vmem:[#allocation0] sm:$0x1] %vm9, %v8
    %s11 = scalar_lea.vmem %s0, 14
    %v12 = vld [vmem:[%s11] sm:$0x1]
    %13 = vrot.lane.b32.xlu0 %v12, 56
    %v14 = vpop.permute.xlu0 %13
    %vm15 = vcmask 490944
    %16 = vst.msk [vmem:[#allocation0] sm:$0x1] %vm15, %v14
    %s17 = scalar_lea.vmem %s0, 13
    %v18 = vld [vmem:[%s17] sm:$0x1]
    %19 = vrot.lane.b32.xlu0 %v18, 52
    %v20 = vpop.permute.xlu0 %19
    %vm21 = vcmask 458144
    %22 = vst.msk [vmem:[#allocation0] sm:$0x1] %vm21, %v20
    %s23 = scalar_lea.vmem %s0, 12
    %v24 = vld [vmem:[%s23] sm:$0x1]
    %25 = vrot.lane.b32.xlu0 %v24, 48
    %v26 = vpop.permute.xlu0 %25
    %vm27 = vcmask 425344
    %28 = vst.msk [vmem:[#allocation0] sm:$0x1] %vm27, %v26
    %s29 = scalar_lea.vmem %s0, 11
    %v30 = vld [vmem:[%s29] sm:$0x1]
    %31 = vrot.lane.b32.xlu0 %v30, 44
    %v32 = vpop.permute.xlu0 %31
    %vm33 = vcmask 392544
    %34 = vst.msk [vmem:[#allocation0] sm:$0x1] %vm33, %v32
    %s35 = scalar_lea.vmem %s0, 10
    %v36 = vld [vmem:[%s35] sm:$0x1]
    %37 = vrot.lane.b32.xlu0 %v36, 40
    %v38 = vpop.permute.xlu0 %37
    %vm39 = vcmask 359744
    %40 = vst.msk [vmem:[#allocation0] sm:$0x1] %vm39, %v38
    %s41 = scalar_lea.vmem %s0, 9
    %v42 = vld [vmem:[%s41] sm:$0x1]
    %43 = vrot.lane.b32.xlu0 %v42, 36
    %v44 = vpop.permute.xlu0 %43
    %vm45 = vcmask 326944
    %46 = vst.msk [vmem:[#allocation0] sm:$0x1] %vm45, %v44
    %s47 = scalar_lea.vmem %s0, 8
    %v48 = vld [vmem:[%s47] sm:$0x1]
    %49 = vrot.lane.b32.xlu0 %v48, 32
    %v50 = vpop.permute.xlu0 %49
    %vm51 = vcmask 294144
    %52 = vst.msk [vmem:[#allocation0] sm:$0x1] %vm51, %v50
    %s53 = scalar_lea.vmem %s0, 7
    %v54 = vld [vmem:[%s53] sm:$0x1]
    %55 = vrot.lane.b32.xlu0 %v54, 28
    %v56 = vpop.permute.xlu0 %55
    %vm57 = vcmask 261344
    %58 = vst.msk [vmem:[#allocation0] sm:$0x1] %vm57, %v56
    %s59 = scalar_lea.vmem %s0, 6
    %v60 = vld [vmem:[%s59] sm:$0x1]
    %61 = vrot.lane.b32.xlu0 %v60, 24
    %v62 = vpop.permute.xlu0 %61
    %vm63 = vcmask 228544
    %64 = vst.msk [vmem:[#allocation0] sm:$0x1] %vm63, %v62
    %s65 = scalar_lea.vmem %s0, 5
    %v66 = vld [vmem:[%s65] sm:$0x1]
    %67 = vrot.lane.b32.xlu0 %v66, 20
    %v68 = vpop.permute.xlu0 %67
    %vm69 = vcmask 195744
    %70 = vst.msk [vmem:[#allocation0] sm:$0x1] %vm69, %v68
    %s71 = scalar_lea.vmem %s0, 4
    %v72 = vld [vmem:[%s71] sm:$0x1]
    %73 = vrot.lane.b32.xlu0 %v72, 16
    %v74 = vpop.permute.xlu0 %73
    %vm75 = vcmask 162944
    %76 = vst.msk [vmem:[#allocation0] sm:$0x1] %vm75, %v74
    %s77 = scalar_lea.vmem %s0, 3
    %v78 = vld [vmem:[%s77] sm:$0x1]
    %79 = vrot.lane.b32.xlu0 %v78, 12
    %v80 = vpop.permute.xlu0 %79
    %vm81 = vcmask 130144
    %82 = vst.msk [vmem:[#allocation0] sm:$0x1] %vm81, %v80
    %s83 = scalar_lea.vmem %s0, 2
    %v84 = vld [vmem:[%s83] sm:$0x1]
    %85 = vrot.lane.b32.xlu0 %v84, 8
    %v86 = vpop.permute.xlu0 %85
    %vm87 = vcmask 97344
    %88 = vst.msk [vmem:[#allocation0] sm:$0x1] %vm87, %v86
    %s89 = scalar_lea.vmem %s0, 1
    %v90 = vld [vmem:[%s89] sm:$0x1]
    %91 = vrot.lane.b32.xlu0 %v90, 4
    %v92 = vpop.permute.xlu0 %91
    %vm93 = vcmask 64544
    %94 = vst.msk [vmem:[#allocation0] sm:$0x1] %vm93, %v92
    %s96 = sshllo.u32 0, 1
    %v98 = vld [vmem:[#allocation0] sm:%s96]
    %s99 = sshllo.u32 0, 1
    %100 = vst [vmem:[%s1] sm:%s99] %v98

// kernel: upsampling_layer_forward.1
$region0: #{upsampling_layer_forward.1}
  #allocation0 [shape = 'u32[]', space=smem, size = 0x4, offset = 0x4, fixed_abs, tag = 'smem constant byte address 0x4 - core index']
  #allocation1 [shape = 'u32[144,128]{1,0:T(1,128)}', space=vmem, size = 0x12000, scoped, tag = 'internal scratch']
  #allocation2 [shape = 'f32[18,128]{1,0:T(8,128)}', space=vmem, size = 0x3000, scoped, tag = 'scratch operand']
  #allocation3 [shape = 'f32[18,128]{1,0:T(8,128)}', space=vmem, size = 0x3000, scoped, tag = 'scratch operand']
  %s0 = inlined_call_operand.vmem [shape: f32[2,8,64], index: 0, kind: input, shape index: {}]
  %s1 = inlined_call_operand.vmem [shape: f32[2,16,64], index: 1, kind: input, shape index: {}]
  %s2 = inlined_call_operand.vmem [shape: f32[64,256], index: 2, kind: input, shape index: {}]
  %s3 = inlined_call_operand.vmem [shape: f32[1,128], index: 3, kind: input, shape index: {}]
  %s4 = inlined_call_operand.vmem [shape: f32[3,128,128], index: 4, kind: input, shape index: {}]
  %s5 = inlined_call_operand.vmem [shape: f32[1,128], index: 5, kind: input, shape index: {}]
  %s6 = inlined_call_operand.vmem [shape: f32[1,128], index: 6, kind: input, shape index: {}]
  %s7 = inlined_call_operand.vmem [shape: f32[3,128,128], index: 7, kind: input, shape index: {}]
  %s8 = inlined_call_operand.vmem [shape: f32[1,128], index: 8, kind: input, shape index: {}]
  %s9 = inlined_call_operand.vmem [shape: f32[1,128], index: 9, kind: input, shape index: {}]
  %s10 = inlined_call_operand.vmem [shape: f32[2,16,128], index: 10, kind: output, shape index: {}]
  %s11 = sld [smem:[#allocation0]]
  $region73: #{upsampling_layer_forward.1} parent=0
    _
  %s13 = ssub.s32 1, %s11
  %s14 = scalar_select 0, %s13, %s11
  loop: start=0, step=1, limit=4
  $region2: #{upsampling_layer_forward.1} parent=0 // loop_pre_header
    _
  $region3: #{upsampling_layer_forward.1} parent=0 // loop_header
    %s16 = sphi 0, %s20
    %p17 = scmp.ge.s32.totalorder %s16, 4
    %s26 = sphi 0, %s28
    %s29 = sphi 0, %s26
    %s30 = sphi 0, %s29
    %s46 = sphi 0, %s30
    %s52 = sphi 0, %s54
    %s55 = sphi 0, %s52
    %s56 = sphi 0, %s55
    %s72 = sphi 0, %s56
    %s76 = sphi 0, %s76
    %s78 = sphi 0, %s76
    %s79 = sphi 0, %s78
    %s93 = sphi 0, %s79
    %s97 = sphi 0, %s97
    %s99 = sphi 0, %s97
    %s100 = sphi 0, %s99
    %s114 = sphi 0, %s100
    %s118 = sphi 0, %s118
    %s120 = sphi 0, %s118
    %s121 = sphi 0, %s120
    %s135 = sphi 0, %s121
    %s139 = sphi 0, %s139
    %s141 = sphi 0, %s139
    %s142 = sphi 0, %s141
    %s156 = sphi 0, %s142
    %s160 = sphi 0, %s160
    %s162 = sphi 0, %s160
    %s163 = sphi 0, %s162
    %s177 = sphi 0, %s163
    %s181 = sphi 0, %s181
    %s183 = sphi 0, %s181
    %s184 = sphi 0, %s183
    %s198 = sphi 0, %s184
    %s202 = sphi 0, %s202
    %s204 = sphi 0, %s202
    %s205 = sphi 0, %s204
    %s219 = sphi 0, %s205
    %s223 = sphi 0, %s223
    %s225 = sphi 0, %s223
    %s226 = sphi 0, %s225
    %s240 = sphi 0, %s226
    %s246 = sphi 0, %s248
    %s249 = sphi 0, %s246
    %s250 = sphi 0, %s249
    %s266 = sphi 0, %s250
  $region4: #{upsampling_layer_forward.1} parent=0 // loop_header_branch
    %19 = sbr.rel (%p17) target = $region8
  $region5: #{upsampling_layer_forward.1} parent=0 // loop_body
    %s21 = ssub.s32 %s16, 1
    %s22 = ssub.s32 %s16, 2
    %s23 = sadd.s32 %s16, 1
    %s24 = ssub.s32 %s16, %s23
    %p25 = scmp.eq.s32.totalorder %s24, 0
    %s27 = sadd.s32 %s26, 1
    %s28 = scalar_select %p25, %s26, %s27
    %p31 = pneg %p25
    %p32 = scmp.eq.s32.totalorder %s16, 1
    %p33 = por %p31, %p32
    %p34 = scmp.ne.s32.totalorder %s26, %s29
    %p35 = scmp.eq.s32.totalorder %s16, 0
    %p36 = por %p34, %p35
    %p37 = scmp.ne.s32.totalorder %s26, %s29
    %p38 = scmp.eq.s32.totalorder %s21, 1
    %p39 = por %p37, %p38
    %p40 = scmp.ne.s32.totalorder %s29, %s30
    %p41 = scmp.eq.s32.totalorder %s21, 0
    %p42 = por %p40, %p41
    %p43 = scmp.ne.s32.totalorder %s29, %s30
    %p44 = scmp.eq.s32.totalorder %s22, 1
    %p45 = por %p43, %p44
    %p47 = scmp.ne.s32.totalorder %s30, %s46
    %p48 = scmp.eq.s32.totalorder %s22, 0
    %p49 = por %p47, %p48
    %s50 = ssub.s32 %s16, %s23
    %p51 = scmp.eq.s32.totalorder %s50, 0
    %s53 = sadd.s32 %s52, 1
    %s54 = scalar_select %p51, %s52, %s53
    %p57 = pneg %p51
    %p58 = scmp.eq.s32.totalorder %s16, 1
    %p59 = por %p57, %p58
    %p60 = scmp.ne.s32.totalorder %s52, %s55
    %p61 = scmp.eq.s32.totalorder %s16, 0
    %p62 = por %p60, %p61
    %p63 = scmp.ne.s32.totalorder %s52, %s55
    %p64 = scmp.eq.s32.totalorder %s21, 1
    %p65 = por %p63, %p64
    %p66 = scmp.ne.s32.totalorder %s55, %s56
    %p67 = scmp.eq.s32.totalorder %s21, 0
    %p68 = por %p66, %p67
    %p69 = scmp.ne.s32.totalorder %s55, %s56
    %p70 = scmp.eq.s32.totalorder %s22, 1
    %p71 = por %p69, %p70
    %p73 = scmp.ne.s32.totalorder %s56, %s72
    %p74 = scmp.eq.s32.totalorder %s22, 0
    %p75 = por %p73, %p74
    %s77 = sadd.s32 %s76, 1
    %p80 = scmp.eq.s32.totalorder %s16, 1
    %p81 = scmp.ne.s32.totalorder %s76, %s78
    %p82 = scmp.eq.s32.totalorder %s16, 0
    %p83 = por %p81, %p82
    %p84 = scmp.ne.s32.totalorder %s76, %s78
    %p85 = scmp.eq.s32.totalorder %s21, 1
    %p86 = por %p84, %p85
    %p87 = scmp.ne.s32.totalorder %s78, %s79
    %p88 = scmp.eq.s32.totalorder %s21, 0
    %p89 = por %p87, %p88
    %p90 = scmp.ne.s32.totalorder %s78, %s79
    %p91 = scmp.eq.s32.totalorder %s22, 1
    %p92 = por %p90, %p91
    %p94 = scmp.ne.s32.totalorder %s79, %s93
    %p95 = scmp.eq.s32.totalorder %s22, 0
    %p96 = por %p94, %p95
    %s98 = sadd.s32 %s97, 1
    %p101 = scmp.eq.s32.totalorder %s16, 1
    %p102 = scmp.ne.s32.totalorder %s97, %s99
    %p103 = scmp.eq.s32.totalorder %s16, 0
    %p104 = por %p102, %p103
    %p105 = scmp.ne.s32.totalorder %s97, %s99
    %p106 = scmp.eq.s32.totalorder %s21, 1
    %p107 = por %p105, %p106
    %p108 = scmp.ne.s32.totalorder %s99, %s100
    %p109 = scmp.eq.s32.totalorder %s21, 0
    %p110 = por %p108, %p109
    %p111 = scmp.ne.s32.totalorder %s99, %s100
    %p112 = scmp.eq.s32.totalorder %s22, 1
    %p113 = por %p111, %p112
    %p115 = scmp.ne.s32.totalorder %s100, %s114
    %p116 = scmp.eq.s32.totalorder %s22, 0
    %p117 = por %p115, %p116
    %s119 = sadd.s32 %s118, 1
    %p122 = scmp.eq.s32.totalorder %s16, 1
    %p123 = scmp.ne.s32.totalorder %s118, %s120
    %p124 = scmp.eq.s32.totalorder %s16, 0
    %p125 = por %p123, %p124
    %p126 = scmp.ne.s32.totalorder %s118, %s120
    %p127 = scmp.eq.s32.totalorder %s21, 1
    %p128 = por %p126, %p127
    %p129 = scmp.ne.s32.totalorder %s120, %s121
    %p130 = scmp.eq.s32.totalorder %s21, 0
    %p131 = por %p129, %p130
    %p132 = scmp.ne.s32.totalorder %s120, %s121
    %p133 = scmp.eq.s32.totalorder %s22, 1
    %p134 = por %p132, %p133
    %p136 = scmp.ne.s32.totalorder %s121, %s135
    %p137 = scmp.eq.s32.totalorder %s22, 0
    %p138 = por %p136, %p137
    %s140 = sadd.s32 %s139, 1
    %p143 = scmp.eq.s32.totalorder %s16, 1
    %p144 = scmp.ne.s32.totalorder %s139, %s141
    %p145 = scmp.eq.s32.totalorder %s16, 0
    %p146 = por %p144, %p145
    %p147 = scmp.ne.s32.totalorder %s139, %s141
    %p148 = scmp.eq.s32.totalorder %s21, 1
    %p149 = por %p147, %p148
    %p150 = scmp.ne.s32.totalorder %s141, %s142
    %p151 = scmp.eq.s32.totalorder %s21, 0
    %p152 = por %p150, %p151
    %p153 = scmp.ne.s32.totalorder %s141, %s142
    %p154 = scmp.eq.s32.totalorder %s22, 1
    %p155 = por %p153, %p154
    %p157 = scmp.ne.s32.totalorder %s142, %s156
    %p158 = scmp.eq.s32.totalorder %s22, 0
    %p159 = por %p157, %p158
    %s161 = sadd.s32 %s160, 1
    %p164 = scmp.eq.s32.totalorder %s16, 1
    %p165 = scmp.ne.s32.totalorder %s160, %s162
    %p166 = scmp.eq.s32.totalorder %s16, 0
    %p167 = por %p165, %p166
    %p168 = scmp.ne.s32.totalorder %s160, %s162
    %p169 = scmp.eq.s32.totalorder %s21, 1
    %p170 = por %p168, %p169
    %p171 = scmp.ne.s32.totalorder %s162, %s163
    %p172 = scmp.eq.s32.totalorder %s21, 0
    %p173 = por %p171, %p172
    %p174 = scmp.ne.s32.totalorder %s162, %s163
    %p175 = scmp.eq.s32.totalorder %s22, 1
    %p176 = por %p174, %p175
    %p178 = scmp.ne.s32.totalorder %s163, %s177
    %p179 = scmp.eq.s32.totalorder %s22, 0
    %p180 = por %p178, %p179
    %s182 = sadd.s32 %s181, 1
    %p185 = scmp.eq.s32.totalorder %s16, 1
    %p186 = scmp.ne.s32.totalorder %s181, %s183
    %p187 = scmp.eq.s32.totalorder %s16, 0
    %p188 = por %p186, %p187
    %p189 = scmp.ne.s32.totalorder %s181, %s183
    %p190 = scmp.eq.s32.totalorder %s21, 1
    %p191 = por %p189, %p190
    %p192 = scmp.ne.s32.totalorder %s183, %s184
    %p193 = scmp.eq.s32.totalorder %s21, 0
    %p194 = por %p192, %p193
    %p195 = scmp.ne.s32.totalorder %s183, %s184
    %p196 = scmp.eq.s32.totalorder %s22, 1
    %p197 = por %p195, %p196
    %p199 = scmp.ne.s32.totalorder %s184, %s198
    %p200 = scmp.eq.s32.totalorder %s22, 0
    %p201 = por %p199, %p200
    %s203 = sadd.s32 %s202, 1
    %p206 = scmp.eq.s32.totalorder %s16, 1
    %p207 = scmp.ne.s32.totalorder %s202, %s204
    %p208 = scmp.eq.s32.totalorder %s16, 0
    %p209 = por %p207, %p208
    %p210 = scmp.ne.s32.totalorder %s202, %s204
    %p211 = scmp.eq.s32.totalorder %s21, 1
    %p212 = por %p210, %p211
    %p213 = scmp.ne.s32.totalorder %s204, %s205
    %p214 = scmp.eq.s32.totalorder %s21, 0
    %p215 = por %p213, %p214
    %p216 = scmp.ne.s32.totalorder %s204, %s205
    %p217 = scmp.eq.s32.totalorder %s22, 1
    %p218 = por %p216, %p217
    %p220 = scmp.ne.s32.totalorder %s205, %s219
    %p221 = scmp.eq.s32.totalorder %s22, 0
    %p222 = por %p220, %p221
    %s224 = sadd.s32 %s223, 1
    %p227 = scmp.eq.s32.totalorder %s16, 1
    %p228 = scmp.ne.s32.totalorder %s223, %s225
    %p229 = scmp.eq.s32.totalorder %s16, 0
    %p230 = por %p228, %p229
    %p231 = scmp.ne.s32.totalorder %s223, %s225
    %p232 = scmp.eq.s32.totalorder %s21, 1
    %p233 = por %p231, %p232
    %p234 = scmp.ne.s32.totalorder %s225, %s226
    %p235 = scmp.eq.s32.totalorder %s21, 0
    %p236 = por %p234, %p235
    %p237 = scmp.ne.s32.totalorder %s225, %s226
    %p238 = scmp.eq.s32.totalorder %s22, 1
    %p239 = por %p237, %p238
    %p241 = scmp.ne.s32.totalorder %s226, %s240
    %p242 = scmp.eq.s32.totalorder %s22, 0
    %p243 = por %p241, %p242
    %s244 = ssub.s32 %s16, %s23
    %p245 = scmp.eq.s32.totalorder %s244, 0
    %s247 = sadd.s32 %s246, 1
    %s248 = scalar_select %p245, %s246, %s247
    %p251 = pneg %p245
    %p252 = scmp.eq.s32.totalorder %s16, 1
    %p253 = por %p251, %p252
    %p254 = scmp.ne.s32.totalorder %s246, %s249
    %p255 = scmp.eq.s32.totalorder %s16, 0
    %p256 = por %p254, %p255
    %p257 = scmp.ne.s32.totalorder %s246, %s249
    %p258 = scmp.eq.s32.totalorder %s21, 1
    %p259 = por %p257, %p258
    %p260 = scmp.ne.s32.totalorder %s249, %s250
    %p261 = scmp.eq.s32.totalorder %s21, 0
    %p262 = por %p260, %p261
    %p263 = scmp.ne.s32.totalorder %s249, %s250
    %p264 = scmp.eq.s32.totalorder %s22, 1
    %p265 = por %p263, %p264
    %p267 = scmp.ne.s32.totalorder %s250, %s266
    %p268 = scmp.eq.s32.totalorder %s22, 0
    %p269 = por %p267, %p268
    %p270 = scmp.le.s32.totalorder 1, %s16
    %p271 = scmp.lt.s32.totalorder %s16, 3
    %p272 = pnand %p270, %p271
    %p273 = pneg %p272
    // Predicated region
    $region9: #{upsampling_layer_forward.1} parent=5 // pred_check
      _
    $region10: #{upsampling_layer_forward.1} parent=5 // pred_check_branch
      %275 = sbr.rel (%p272) target = $region12
    $region11: #{upsampling_layer_forward.1} parent=5 // pred_region
      %s276 = ssub.s32 %s16, 1
      // Predicated region
      $region13: #{upsampling_layer_forward.1} parent=11 // pred_check
        %p277 = pneg %p89
      $region14: #{upsampling_layer_forward.1} parent=11 // pred_check_branch
        %279 = sbr.rel (%p277) target = $region16
      $region15: #{upsampling_layer_forward.1} parent=11 // pred_region
        _
      $region16: #{upsampling_layer_forward.1} parent=11 // pred_fallthru
        _
      // Predicated region
      $region17: #{upsampling_layer_forward.1} parent=11 // pred_check
        %p280 = pneg %p110
      $region18: #{upsampling_layer_forward.1} parent=11 // pred_check_branch
        %282 = sbr.rel (%p280) target = $region20
      $region19: #{upsampling_layer_forward.1} parent=11 // pred_region
        _
      $region20: #{upsampling_layer_forward.1} parent=11 // pred_fallthru
        _
      // Predicated region
      $region21: #{upsampling_layer_forward.1} parent=11 // pred_check
        %p283 = pneg %p131
      $region22: #{upsampling_layer_forward.1} parent=11 // pred_check_branch
        %285 = sbr.rel (%p283) target = $region24
      $region23: #{upsampling_layer_forward.1} parent=11 // pred_region
        _
      $region24: #{upsampling_layer_forward.1} parent=11 // pred_fallthru
        _
      // Predicated region
      $region25: #{upsampling_layer_forward.1} parent=11 // pred_check
        %p286 = pneg %p152
      $region26: #{upsampling_layer_forward.1} parent=11 // pred_check_branch
        %288 = sbr.rel (%p286) target = $region28
      $region27: #{upsampling_layer_forward.1} parent=11 // pred_region
        _
      $region28: #{upsampling_layer_forward.1} parent=11 // pred_fallthru
        _
      // Predicated region
      $region29: #{upsampling_layer_forward.1} parent=11 // pred_check
        %p289 = pneg %p173
      $region30: #{upsampling_layer_forward.1} parent=11 // pred_check_branch
        %291 = sbr.rel (%p289) target = $region32
      $region31: #{upsampling_layer_forward.1} parent=11 // pred_region
        _
      $region32: #{upsampling_layer_forward.1} parent=11 // pred_fallthru
        _
      // Predicated region
      $region33: #{upsampling_layer_forward.1} parent=11 // pred_check
        %p292 = pneg %p194
      $region34: #{upsampling_layer_forward.1} parent=11 // pred_check_branch
        %294 = sbr.rel (%p292) target = $region36
      $region35: #{upsampling_layer_forward.1} parent=11 // pred_region
        _
      $region36: #{upsampling_layer_forward.1} parent=11 // pred_fallthru
        _
      // Predicated region
      $region37: #{upsampling_layer_forward.1} parent=11 // pred_check
        %p295 = pneg %p215
      $region38: #{upsampling_layer_forward.1} parent=11 // pred_check_branch
        %297 = sbr.rel (%p295) target = $region40
      $region39: #{upsampling_layer_forward.1} parent=11 // pred_region
        _
      $region40: #{upsampling_layer_forward.1} parent=11 // pred_fallthru
        _
      // Predicated region
      $region41: #{upsampling_layer_forward.1} parent=11 // pred_check
        %p298 = pneg %p236
      $region42: #{upsampling_layer_forward.1} parent=11 // pred_check_branch
        %300 = sbr.rel (%p298) target = $region44
      $region43: #{upsampling_layer_forward.1} parent=11 // pred_region
        _
      $region44: #{upsampling_layer_forward.1} parent=11 // pred_fallthru
        _
    $region12: #{upsampling_layer_forward.1} parent=5 // pred_fallthru
      _
    %p301 = scmp.lt.s32.totalorder %s16, 2
    // Predicated region
    $region45: #{upsampling_layer_forward.1} parent=5 // pred_check
      %p302 = pneg %p301
    $region46: #{upsampling_layer_forward.1} parent=5 // pred_check_branch
      %304 = sbr.rel (%p302) target = $region48
    $region47: #{upsampling_layer_forward.1} parent=5 // pred_region
      // Predicated region
      $region49: #{upsampling_layer_forward.1} parent=47 // pred_check
        %p305 = pneg %p36
      $region50: #{upsampling_layer_forward.1} parent=47 // pred_check_branch
        %307 = sbr.rel (%p305) target = $region52
      $region51: #{upsampling_layer_forward.1} parent=47 // pred_region
        %p308 = scmp.lt.s32.totalorder %s16, 1
        %s309 = scalar_select %p308, %s16, 1
        %s310 = smul.addr %s309, 8
        %s311 = scalar_lea.vmem %s0, %s310
      $region52: #{upsampling_layer_forward.1} parent=47 // pred_fallthru
        _
      // Predicated region
      $region53: #{upsampling_layer_forward.1} parent=47 // pred_check
        %p312 = pneg %p62
      $region54: #{upsampling_layer_forward.1} parent=47 // pred_check_branch
        %314 = sbr.rel (%p312) target = $region56
      $region55: #{upsampling_layer_forward.1} parent=47 // pred_region
        %p315 = scmp.lt.s32.totalorder %s16, 1
        %s316 = scalar_select %p315, %s16, 1
        %s317 = smul.addr %s316, 2
        %s318 = smul.addr %s317, 8
        %s319 = scalar_lea.vmem %s1, %s318
      $region56: #{upsampling_layer_forward.1} parent=47 // pred_fallthru
        _
    $region48: #{upsampling_layer_forward.1} parent=5 // pred_fallthru
      _
    %p320 = scmp.le.s32.totalorder 1, %s16
    %p321 = scmp.lt.s32.totalorder %s16, 3
    %p322 = pnand %p320, %p321
    %p323 = pneg %p322
    // Predicated region
    $region57: #{upsampling_layer_forward.1} parent=5 // pred_check
      _
    $region58: #{upsampling_layer_forward.1} parent=5 // pred_check_branch
      %325 = sbr.rel (%p322) target = $region60
    $region59: #{upsampling_layer_forward.1} parent=5 // pred_region
      %s326 = ssub.s32 %s16, 1
      %p327 = scmp.lt.s32.totalorder %s21, 1
      %s328 = scalar_select %p327, %s21, 1
      %s329 = smul.addr %s328, 8
      %s330 = scalar_lea.vmem %s0, %s329
      %p331 = pneg %p42
      %p332 = pneg %p39
      %p333 = scmp.lt.s32.totalorder %s21, 1
      %s334 = scalar_select %p333, %s21, 1
      %s335 = smul.addr %s334, 2
      %s336 = smul.addr %s335, 8
      %s337 = scalar_lea.vmem %s1, %s336
      %p338 = pneg %p68
      %p339 = pneg %p65
      %p340 = pneg %p89
      %p341 = pneg %p86
      %p342 = pneg %p110
      %p343 = pneg %p107
      %p344 = pneg %p131
      %p345 = pneg %p128
      %p346 = pneg %p152
      %p347 = pneg %p149
      %p348 = pneg %p173
      %p349 = pneg %p170
      %p350 = pneg %p194
      %p351 = pneg %p191
      %p352 = pneg %p215
      %p353 = pneg %p212
      %p354 = pneg %p236
      %p355 = pneg %p233
      %p356 = pneg %p262
      %p357 = pneg %p259
      %p358 = scmp.lt.s32.totalorder %s21, 1
      %s359 = scalar_select %p358, %s21, 1
      %s360 = smul.addr %s359, 2
      %s361 = smul.addr %s360, 8
      %s362 = scalar_lea.vmem %s10, %s361
      %p363 = scmp.lt.s32.totalorder %s21, 1
      %s364 = scalar_select %p363, %s21, 1
      %s365 = smul.addr %s364, 8
      %s366 = scalar_lea.vmem %s0, %s365
      %p367 = scmp.lt.s32.totalorder %s21, 1
      %s368 = scalar_select %p367, %s21, 1
      %s369 = smul.addr %s368, 2
      %s370 = smul.addr %s369, 8
      %s371 = scalar_lea.vmem %s1, %s370
      %p372 = scmp.lt.s32.totalorder %s21, 1
      %s373 = scalar_select %p372, %s21, 1
      %s374 = smul.addr %s373, 2
      %s375 = smul.addr %s374, 8
      %s376 = scalar_lea.vmem %s10, %s375
      %v377 = vld [vmem:[%s366] sm:$0xff]
      %v378 = vld [vmem:[%s2] sm:$0xff]
      %v379 = vld [vmem:[%s2 + $0x8] sm:$0xff]
      %v380 = vld [vmem:[%s2 + $0x10] sm:$0xff]
      %v381 = vld [vmem:[%s2 + $0x18] sm:$0xff]
      %v382 = vld [vmem:[%s2 + $0x20] sm:$0xff]
      %v383 = vld [vmem:[%s2 + $0x28] sm:$0xff]
      %v384 = vld [vmem:[%s2 + $0x30] sm:$0xff]
      %v385 = vld [vmem:[%s2 + $0x38] sm:$0xff]
      %v386 = vld [vmem:[%s2 + $0x40] sm:$0xff]
      %v387 = vld [vmem:[%s2 + $0x48] sm:$0xff]
      %v388 = vld [vmem:[%s2 + $0x50] sm:$0xff]
      %v389 = vld [vmem:[%s2 + $0x58] sm:$0xff]
      %v390 = vld [vmem:[%s2 + $0x60] sm:$0xff]
      %v391 = vld [vmem:[%s2 + $0x68] sm:$0xff]
      %v392 = vld [vmem:[%s2 + $0x70] sm:$0xff]
      %v393 = vld [vmem:[%s2 + $0x78] sm:$0xff]
      %vm394 = vcmask 523264
      %v396 = vsel %vm394, %v377, 0
      %398 = vmatprep.subr.mxu0 %v379
      %399 = vmatpush1.msra.mxu0 %v378
      %400 = vmatprep.subr.mxu0 %v381
      %401 = vmatpush1.msra.mxu0 %v380
      %402 = vmatprep.subr.mxu0 %v383
      %403 = vmatpush1.msra.mxu0 %v382
      %404 = vmatprep.subr.mxu0 %v385
      %405 = vmatpush1.msra.mxu0 %v384
      %406 = vmatprep.subr.mxu0 %v387
      %407 = vmatpush1.msra.mxu0 %v386
      %408 = vmatprep.subr.mxu0 %v389
      %409 = vmatpush1.msra.mxu0 %v388
      %410 = vmatprep.subr.mxu0 %v391
      %411 = vmatpush1.msra.mxu0 %v390
      %412 = vmatprep.subr.mxu0 %v393
      %413 = vmatpush1.msra.mxu0 %v392
      %414 = vmatprep.subr.mxu0 0.0
      %415 = vmatpush1.msra.mxu0 0.0
      %416 = vmatprep.subr.mxu0 0.0
      %417 = vmatpush1.msra.mxu0 0.0
      %418 = vmatprep.subr.mxu0 0.0
      %419 = vmatpush1.msra.mxu0 0.0
      %420 = vmatprep.subr.mxu0 0.0
      %421 = vmatpush1.msra.mxu0 0.0
      %422 = vmatprep.subr.mxu0 0.0
      %423 = vmatpush1.msra.mxu0 0.0
      %424 = vmatprep.subr.mxu0 0.0
      %425 = vmatpush1.msra.mxu0 0.0
      %426 = vmatprep.subr.mxu0 0.0
      %427 = vmatpush1.msra.mxu0 0.0
      %428 = vmatprep.subr.mxu0 0.0
      %429 = vmatpush1.msra.mxu0 0.0
      %430 = vmatprep.subr.mxu0 0.0
      %431 = vmatpush1.msra.mxu0 0.0
      %432 = vmatprep.subr.mxu0 0.0
      %433 = vmatpush1.msra.mxu0 0.0
      %434 = vmatprep.subr.mxu0 0.0
      %435 = vmatpush1.msra.mxu0 0.0
      %436 = vmatprep.subr.mxu0 0.0
      %437 = vmatpush1.msra.mxu0 0.0
      %438 = vmatprep.subr.mxu0 0.0
      %439 = vmatpush1.msra.mxu0 0.0
      %440 = vmatprep.subr.mxu0 0.0
      %441 = vmatpush1.msra.mxu0 0.0
      %442 = vmatprep.subr.mxu0 0.0
      %443 = vmatpush1.msra.mxu0 0.0
      %444 = vmatprep.subr.mxu0 0.0
      %445 = vmatpush1.msra.mxu0 0.0
      %446 = vmatprep.subr.mxu0 0.0
      %447 = vmatpush1.msra.mxu0 0.0
      %448 = vmatprep.subr.mxu0 0.0
      %449 = vmatpush1.msra.mxu0 0.0
      %450 = vmatprep.subr.mxu0 0.0
      %451 = vmatpush1.msra.mxu0 0.0
      %452 = vmatprep.subr.mxu0 0.0
      %453 = vmatpush1.msra.mxu0 0.0
      %454 = vmatprep.subr.mxu0 0.0
      %455 = vmatpush1.msra.mxu0 0.0
      %456 = vmatprep.subr.mxu0 0.0
      %457 = vmatpush1.msra.mxu0 0.0
      %458 = vmatprep.subr.mxu0 0.0
      %459 = vmatpush1.msra.mxu0 0.0
      %460 = vmatprep.subr.mxu0 0.0
      %461 = vmatpush1.msra.mxu0 0.0
      %462 = vmatprep.mubr.f32.mxu0 0.0
      %463 = vmatmul.mubr.f32.gmra.mrb[0].mxu0 %v396
      %v464 = vpop.f32.mrb[0].mxu0
      %v465 = vadd.f32 0.0, %v464
      %v466 = vpop.f32.mrb[0].mxu0
      %v467 = vadd.f32 0.0, %v466
      %468 = vdwg.mxu0
      %v469 = vlaneseq
      %v470 = vshrl.u32 %v469, 7
      %v471 = vadd.s32 %v470, 8
      %v472 = vlaneseq
      %v473 = vand.u32 %v472, 127
      %v474 = vadd.s32 %v473, %v473
      %vm475 = vcmp.eq.s32.totalorder %v474, %v470
      %vm476 = vcmp.eq.s32.totalorder %v474, %v471
      %v477 = vadd.s32 %v474, 4294967281
      %vm478 = vcmp.eq.s32.totalorder %v477, %v470
      %vm479 = vcmp.eq.s32.totalorder %v477, %v471
      %vm480 = vmor %vm475, %vm478
      %vm481 = vmor %vm476, %vm479
      %v482 = vsel %vm480, 1, 0
      %v483 = vsel %vm481, 1, 0
      %v484 = vcvt.s32.f32 %v482
      %v485 = vcvt.s32.f32 %v483
      %vm486 = vcmask 130048
      %v488 = vsel %vm486, %v484, 0
      %v491 = vsel %vm486, %v485, 0
      %493 = vmatprep.subr.mxu0 0.0
      %494 = vmatpush1.msra.mxu0 %v465
      %495 = vmatprep.subr.mxu0 0.0
      %496 = vmatpush1.msra.mxu0 %v467
      %497 = vmatprep.subr.mxu0 0.0
      %498 = vmatpush1.msra.mxu0 0.0
      %499 = vmatprep.subr.mxu0 0.0
      %500 = vmatpush1.msra.mxu0 0.0
      %501 = vmatprep.subr.mxu0 0.0
      %502 = vmatpush1.msra.mxu0 0.0
      %503 = vmatprep.subr.mxu0 0.0
      %504 = vmatpush1.msra.mxu0 0.0
      %505 = vmatprep.subr.mxu0 0.0
      %506 = vmatpush1.msra.mxu0 0.0
      %507 = vmatprep.subr.mxu0 0.0
      %508 = vmatpush1.msra.mxu0 0.0
      %509 = vmatprep.subr.mxu0 0.0
      %510 = vmatpush1.msra.mxu0 0.0
      %511 = vmatprep.subr.mxu0 0.0
      %512 = vmatpush1.msra.mxu0 0.0
      %513 = vmatprep.subr.mxu0 0.0
      %514 = vmatpush1.msra.mxu0 0.0
      %515 = vmatprep.subr.mxu0 0.0
      %516 = vmatpush1.msra.mxu0 0.0
      %517 = vmatprep.subr.mxu0 0.0
      %518 = vmatpush1.msra.mxu0 0.0
      %519 = vmatprep.subr.mxu0 0.0
      %520 = vmatpush1.msra.mxu0 0.0
      %521 = vmatprep.subr.mxu0 0.0
      %522 = vmatpush1.msra.mxu0 0.0
      %523 = vmatprep.subr.mxu0 0.0
      %524 = vmatpush1.msra.mxu0 0.0
      %525 = vmatprep.subr.mxu0 0.0
      %526 = vmatpush1.msra.mxu0 0.0
      %527 = vmatprep.subr.mxu0 0.0
      %528 = vmatpush1.msra.mxu0 0.0
      %529 = vmatprep.subr.mxu0 0.0
      %530 = vmatpush1.msra.mxu0 0.0
      %531 = vmatprep.subr.mxu0 0.0
      %532 = vmatpush1.msra.mxu0 0.0
      %533 = vmatprep.subr.mxu0 0.0
      %534 = vmatpush1.msra.mxu0 0.0
      %535 = vmatprep.subr.mxu0 0.0
      %536 = vmatpush1.msra.mxu0 0.0
      %537 = vmatprep.subr.mxu0 0.0
      %538 = vmatpush1.msra.mxu0 0.0
      %539 = vmatprep.subr.mxu0 0.0
      %540 = vmatpush1.msra.mxu0 0.0
      %541 = vmatprep.subr.mxu0 0.0
      %542 = vmatpush1.msra.mxu0 0.0
      %543 = vmatprep.subr.mxu0 0.0
      %544 = vmatpush1.msra.mxu0 0.0
      %545 = vmatprep.subr.mxu0 0.0
      %546 = vmatpush1.msra.mxu0 0.0
      %547 = vmatprep.subr.mxu0 0.0
      %548 = vmatpush1.msra.mxu0 0.0
      %549 = vmatprep.subr.mxu0 0.0
      %550 = vmatpush1.msra.mxu0 0.0
      %551 = vmatprep.subr.mxu0 0.0
      %552 = vmatpush1.msra.mxu0 0.0
      %553 = vmatprep.subr.mxu0 0.0
      %554 = vmatpush1.msra.mxu0 0.0
      %555 = vmatprep.subr.mxu0 0.0
      %556 = vmatpush1.msra.mxu0 0.0
      %557 = vmatprep.mubr.f32.mxu0 0.0
      %558 = vmatmul.mubr.f32.gmra.mrb[0].mxu0 %v488
      %v559 = vpop.f32.mrb[0].mxu0
      %v560 = vadd.f32 0.0, %v559
      %v561 = vpop.f32.mrb[0].mxu0
      %562 = vmatprep.mubr.f32.mxu0 0.0
      %563 = vmatmul.mubr.f32.gmra.mrb[0].mxu0 %v491
      %v564 = vpop.f32.mrb[0].mxu0
      %v565 = vadd.f32 0.0, %v564
      %v566 = vpop.f32.mrb[0].mxu0
      %567 = vdwg.mxu0
      %v568 = vadd.s32 %v470, 16
      %v569 = vadd.s32 %v470, 24
      %v570 = vadd.s32 %v470, 32
      %v571 = vadd.s32 %v470, 40
      %v572 = vadd.s32 %v470, 48
      %v573 = vadd.s32 %v470, 56
      %vm574 = vcmp.eq.s32.totalorder %v470, %v473
      %vm575 = vcmp.eq.s32.totalorder %v471, %v473
      %vm576 = vcmp.eq.s32.totalorder %v568, %v473
      %vm577 = vcmp.eq.s32.totalorder %v569, %v473
      %vm578 = vcmp.eq.s32.totalorder %v570, %v473
      %vm579 = vcmp.eq.s32.totalorder %v571, %v473
      %vm580 = vcmp.eq.s32.totalorder %v572, %v473
      %vm581 = vcmp.eq.s32.totalorder %v573, %v473
      %v582 = vsel %vm574, 1, 0
      %v583 = vsel %vm575, 1, 0
      %v584 = vsel %vm576, 1, 0
      %v585 = vsel %vm577, 1, 0
      %v586 = vsel %vm578, 1, 0
      %v587 = vsel %vm579, 1, 0
      %v588 = vsel %vm580, 1, 0
      %v589 = vsel %vm581, 1, 0
      %v590 = vcvt.s32.f32 %v582
      %v591 = vcvt.s32.f32 %v583
      %v592 = vcvt.s32.f32 %v584
      %v593 = vcvt.s32.f32 %v585
      %v594 = vcvt.s32.f32 %v586
      %v595 = vcvt.s32.f32 %v587
      %v596 = vcvt.s32.f32 %v588
      %v597 = vcvt.s32.f32 %v589
      %v598 = vld [vmem:[%s371] sm:$0xff]
      %v599 = vld [vmem:[%s371 + $0x8] sm:$0xff]
      %v601 = vsel %vm394, %v598, 0
      %v604 = vsel %vm394, %v599, 0
      %606 = vmatprep.subr.mxu0 0.0
      %607 = vmatpush1.msra.mxu0 %v590
      %608 = vmatprep.subr.mxu0 0.0
      %609 = vmatpush1.msra.mxu0 %v591
      %610 = vmatprep.subr.mxu0 0.0
      %611 = vmatpush1.msra.mxu0 %v592
      %612 = vmatprep.subr.mxu0 0.0
      %613 = vmatpush1.msra.mxu0 %v593
      %614 = vmatprep.subr.mxu0 0.0
      %615 = vmatpush1.msra.mxu0 %v594
      %616 = vmatprep.subr.mxu0 0.0
      %617 = vmatpush1.msra.mxu0 %v595
      %618 = vmatprep.subr.mxu0 0.0
      %619 = vmatpush1.msra.mxu0 %v596
      %620 = vmatprep.subr.mxu0 0.0
      %621 = vmatpush1.msra.mxu0 %v597
      %622 = vmatprep.subr.mxu0 0.0
      %623 = vmatpush1.msra.mxu0 0.0
      %624 = vmatprep.subr.mxu0 0.0
      %625 = vmatpush1.msra.mxu0 0.0
      %626 = vmatprep.subr.mxu0 0.0
      %627 = vmatpush1.msra.mxu0 0.0
      %628 = vmatprep.subr.mxu0 0.0
      %629 = vmatpush1.msra.mxu0 0.0
      %630 = vmatprep.subr.mxu0 0.0
      %631 = vmatpush1.msra.mxu0 0.0
      %632 = vmatprep.subr.mxu0 0.0
      %633 = vmatpush1.msra.mxu0 0.0
      %634 = vmatprep.subr.mxu0 0.0
      %635 = vmatpush1.msra.mxu0 0.0
      %636 = vmatprep.subr.mxu0 0.0
      %637 = vmatpush1.msra.mxu0 0.0
      %638 = vmatprep.subr.mxu0 0.0
      %639 = vmatpush1.msra.mxu0 0.0
      %640 = vmatprep.subr.mxu0 0.0
      %641 = vmatpush1.msra.mxu0 0.0
      %642 = vmatprep.subr.mxu0 0.0
      %643 = vmatpush1.msra.mxu0 0.0
      %644 = vmatprep.subr.mxu0 0.0
      %645 = vmatpush1.msra.mxu0 0.0
      %646 = vmatprep.subr.mxu0 0.0
      %647 = vmatpush1.msra.mxu0 0.0
      %648 = vmatprep.subr.mxu0 0.0
      %649 = vmatpush1.msra.mxu0 0.0
      %650 = vmatprep.subr.mxu0 0.0
      %651 = vmatpush1.msra.mxu0 0.0
      %652 = vmatprep.subr.mxu0 0.0
      %653 = vmatpush1.msra.mxu0 0.0
      %654 = vmatprep.subr.mxu0 0.0
      %655 = vmatpush1.msra.mxu0 0.0
      %656 = vmatprep.subr.mxu0 0.0
      %657 = vmatpush1.msra.mxu0 0.0
      %658 = vmatprep.subr.mxu0 0.0
      %659 = vmatpush1.msra.mxu0 0.0
      %660 = vmatprep.subr.mxu0 0.0
      %661 = vmatpush1.msra.mxu0 0.0
      %662 = vmatprep.subr.mxu0 0.0
      %663 = vmatpush1.msra.mxu0 0.0
      %664 = vmatprep.subr.mxu0 0.0
      %665 = vmatpush1.msra.mxu0 0.0
      %666 = vmatprep.subr.mxu0 0.0
      %667 = vmatpush1.msra.mxu0 0.0
      %668 = vmatprep.subr.mxu0 0.0
      %669 = vmatpush1.msra.mxu0 0.0
      %670 = vmatprep.mubr.f32.mxu0 0.0
      %671 = vmatmul.mubr.f32.gmra.mrb[0].mxu0 %v601
      %v672 = vpop.f32.mrb[0].mxu0
      %v673 = vadd.f32 %v560, %v672
      %v674 = vpop.f32.mrb[0].mxu0
      %675 = vmatprep.mubr.f32.mxu0 0.0
      %676 = vmatmul.mubr.f32.gmra.mrb[0].mxu0 %v604
      %v677 = vpop.f32.mrb[0].mxu0
      %v678 = vadd.f32 %v565, %v677
      %v679 = vpop.f32.mrb[0].mxu0
      %680 = vdwg.mxu0
      %v681 = vld [vmem:[%s3] sm:$0x1]
      %v683 = vlaneseq
      %v684 = vshrl.u32 %v683, 7
      %v685 = vsub.s32 0, %v684
      %v686 = vrot.slane %v681, %v685
      %v688 = vadd.f32 %v673, %v686
      %v689 = vadd.f32 %v678, %v686
      %690 = vst [vmem:[#allocation2] sm:$0x1] 0.0
      %691 = vst [vmem:[#allocation2 + $0x11] sm:$0x1] 0.0
      %692 = vst [vmem:[#allocation2 + $0x1] sm:$0xff] %v688
      %693 = vst [vmem:[#allocation2 + $0x9] sm:$0xff] %v689
      %v694 = vld [vmem:[#allocation2] sm:$0xff]
      %v695 = vld [vmem:[#allocation2 + $0x8] sm:$0xff]
      %v696 = vld [vmem:[%s4] sm:$0xff]
      %v697 = vld [vmem:[%s4 + $0x8] sm:$0xff]
      %v698 = vld [vmem:[%s4 + $0x10] sm:$0xff]
      %v699 = vld [vmem:[%s4 + $0x18] sm:$0xff]
      %v700 = vld [vmem:[%s4 + $0x20] sm:$0xff]
      %v701 = vld [vmem:[%s4 + $0x28] sm:$0xff]
      %v702 = vld [vmem:[%s4 + $0x30] sm:$0xff]
      %v703 = vld [vmem:[%s4 + $0x38] sm:$0xff]
      %v704 = vld [vmem:[%s4 + $0x40] sm:$0xff]
      %v705 = vld [vmem:[%s4 + $0x48] sm:$0xff]
      %v706 = vld [vmem:[%s4 + $0x50] sm:$0xff]
      %v707 = vld [vmem:[%s4 + $0x58] sm:$0xff]
      %v708 = vld [vmem:[%s4 + $0x60] sm:$0xff]
      %v709 = vld [vmem:[%s4 + $0x68] sm:$0xff]
      %v710 = vld [vmem:[%s4 + $0x70] sm:$0xff]
      %v711 = vld [vmem:[%s4 + $0x78] sm:$0xff]
      %v712 = vld [vmem:[#allocation2 + $0x1] sm:$0xff]
      %v713 = vld [vmem:[#allocation2 + $0x9] sm:$0xff]
      %s714 = scalar_lea.vmem %s4, 128
      %v715 = vld [vmem:[%s714] sm:$0xff]
      %v716 = vld [vmem:[%s714 + $0x8] sm:$0xff]
      %v717 = vld [vmem:[%s714 + $0x10] sm:$0xff]
      %v718 = vld [vmem:[%s714 + $0x18] sm:$0xff]
      %v719 = vld [vmem:[%s714 + $0x20] sm:$0xff]
      %v720 = vld [vmem:[%s714 + $0x28] sm:$0xff]
      %v721 = vld [vmem:[%s714 + $0x30] sm:$0xff]
      %v722 = vld [vmem:[%s714 + $0x38] sm:$0xff]
      %v723 = vld [vmem:[%s714 + $0x40] sm:$0xff]
      %v724 = vld [vmem:[%s714 + $0x48] sm:$0xff]
      %v725 = vld [vmem:[%s714 + $0x50] sm:$0xff]
      %v726 = vld [vmem:[%s714 + $0x58] sm:$0xff]
      %v727 = vld [vmem:[%s714 + $0x60] sm:$0xff]
      %v728 = vld [vmem:[%s714 + $0x68] sm:$0xff]
      %v729 = vld [vmem:[%s714 + $0x70] sm:$0xff]
      %v730 = vld [vmem:[%s714 + $0x78] sm:$0xff]
      %731 = vmatprep.subr.mxu0 0.0
      %732 = vmatpush1.msra.mxu0 %v715
      %733 = vmatprep.subr.mxu0 0.0
      %734 = vmatpush1.msra.mxu0 %v716
      %735 = vmatprep.subr.mxu0 0.0
      %736 = vmatpush1.msra.mxu0 %v717
      %737 = vmatprep.subr.mxu0 0.0
      %738 = vmatpush1.msra.mxu0 %v718
      %739 = vmatprep.subr.mxu0 0.0
      %740 = vmatpush1.msra.mxu0 %v719
      %741 = vmatprep.subr.mxu0 0.0
      %742 = vmatpush1.msra.mxu0 %v720
      %743 = vmatprep.subr.mxu0 0.0
      %744 = vmatpush1.msra.mxu0 %v721
      %745 = vmatprep.subr.mxu0 0.0
      %746 = vmatpush1.msra.mxu0 %v722
      %747 = vmatprep.subr.mxu0 0.0
      %748 = vmatpush1.msra.mxu0 %v723
      %749 = vmatprep.subr.mxu0 0.0
      %750 = vmatpush1.msra.mxu0 %v724
      %751 = vmatprep.subr.mxu0 0.0
      %752 = vmatpush1.msra.mxu0 %v725
      %753 = vmatprep.subr.mxu0 0.0
      %754 = vmatpush1.msra.mxu0 %v726
      %755 = vmatprep.subr.mxu0 0.0
      %756 = vmatpush1.msra.mxu0 %v727
      %757 = vmatprep.subr.mxu0 0.0
      %758 = vmatpush1.msra.mxu0 %v728
      %759 = vmatprep.subr.mxu0 0.0
      %760 = vmatpush1.msra.mxu0 %v729
      %761 = vmatprep.subr.mxu0 0.0
      %762 = vmatpush1.msra.mxu0 %v730
      %763 = vmatprep.subr.mxu0 0.0
      %764 = vmatpush1.msra.mxu0 0.0
      %765 = vmatprep.subr.mxu0 0.0
      %766 = vmatpush1.msra.mxu0 0.0
      %767 = vmatprep.subr.mxu0 0.0
      %768 = vmatpush1.msra.mxu0 0.0
      %769 = vmatprep.subr.mxu0 0.0
      %770 = vmatpush1.msra.mxu0 0.0
      %771 = vmatprep.subr.mxu0 0.0
      %772 = vmatpush1.msra.mxu0 0.0
      %773 = vmatprep.subr.mxu0 0.0
      %774 = vmatpush1.msra.mxu0 0.0
      %775 = vmatprep.subr.mxu0 0.0
      %776 = vmatpush1.msra.mxu0 0.0
      %777 = vmatprep.subr.mxu0 0.0
      %778 = vmatpush1.msra.mxu0 0.0
      %779 = vmatprep.subr.mxu0 0.0
      %780 = vmatpush1.msra.mxu0 0.0
      %781 = vmatprep.subr.mxu0 0.0
      %782 = vmatpush1.msra.mxu0 0.0
      %783 = vmatprep.subr.mxu0 0.0
      %784 = vmatpush1.msra.mxu0 0.0
      %785 = vmatprep.subr.mxu0 0.0
      %786 = vmatpush1.msra.mxu0 0.0
      %787 = vmatprep.subr.mxu0 0.0
      %788 = vmatpush1.msra.mxu0 0.0
      %789 = vmatprep.subr.mxu0 0.0
      %790 = vmatpush1.msra.mxu0 0.0
      %791 = vmatprep.subr.mxu0 0.0
      %792 = vmatpush1.msra.mxu0 0.0
      %793 = vmatprep.subr.mxu0 0.0
      %794 = vmatpush1.msra.mxu0 0.0
      %795 = vmatprep.mubr.f32.mxu0 0.0
      %796 = vmatmul.mubr.f32.gmra.mrb[0].mxu0 %v712
      %v797 = vpop.f32.mrb[0].mxu0
      %v798 = vadd.f32 0.0, %v797
      %v799 = vpop.f32.mrb[0].mxu0
      %800 = vmatprep.mubr.f32.mxu0 0.0
      %801 = vmatmul.mubr.f32.gmra.mrb[0].mxu0 %v713
      %v802 = vpop.f32.mrb[0].mxu0
      %v803 = vadd.f32 0.0, %v802
      %v804 = vpop.f32.mrb[0].mxu0
      %805 = vdwg.mxu0
      %806 = vmatprep.subr.mxu0 0.0
      %807 = vmatpush1.msra.mxu0 %v696
      %808 = vmatprep.subr.mxu0 0.0
      %809 = vmatpush1.msra.mxu0 %v697
      %810 = vmatprep.subr.mxu0 0.0
      %811 = vmatpush1.msra.mxu0 %v698
      %812 = vmatprep.subr.mxu0 0.0
      %813 = vmatpush1.msra.mxu0 %v699
      %814 = vmatprep.subr.mxu0 0.0
      %815 = vmatpush1.msra.mxu0 %v700
      %816 = vmatprep.subr.mxu0 0.0
      %817 = vmatpush1.msra.mxu0 %v701
      %818 = vmatprep.subr.mxu0 0.0
      %819 = vmatpush1.msra.mxu0 %v702
      %820 = vmatprep.subr.mxu0 0.0
      %821 = vmatpush1.msra.mxu0 %v703
      %822 = vmatprep.subr.mxu0 0.0
      %823 = vmatpush1.msra.mxu0 %v704
      %824 = vmatprep.subr.mxu0 0.0
      %825 = vmatpush1.msra.mxu0 %v705
      %826 = vmatprep.subr.mxu0 0.0
      %827 = vmatpush1.msra.mxu0 %v706
      %828 = vmatprep.subr.mxu0 0.0
      %829 = vmatpush1.msra.mxu0 %v707
      %830 = vmatprep.subr.mxu0 0.0
      %831 = vmatpush1.msra.mxu0 %v708
      %832 = vmatprep.subr.mxu0 0.0
      %833 = vmatpush1.msra.mxu0 %v709
      %834 = vmatprep.subr.mxu0 0.0
      %835 = vmatpush1.msra.mxu0 %v710
      %836 = vmatprep.subr.mxu0 0.0
      %837 = vmatpush1.msra.mxu0 %v711
      %838 = vmatprep.subr.mxu0 0.0
      %839 = vmatpush1.msra.mxu0 0.0
      %840 = vmatprep.subr.mxu0 0.0
      %841 = vmatpush1.msra.mxu0 0.0
      %842 = vmatprep.subr.mxu0 0.0
      %843 = vmatpush1.msra.mxu0 0.0
      %844 = vmatprep.subr.mxu0 0.0
      %845 = vmatpush1.msra.mxu0 0.0
      %846 = vmatprep.subr.mxu0 0.0
      %847 = vmatpush1.msra.mxu0 0.0
      %848 = vmatprep.subr.mxu0 0.0
      %849 = vmatpush1.msra.mxu0 0.0
      %850 = vmatprep.subr.mxu0 0.0
      %851 = vmatpush1.msra.mxu0 0.0
      %852 = vmatprep.subr.mxu0 0.0
      %853 = vmatpush1.msra.mxu0 0.0
      %854 = vmatprep.subr.mxu0 0.0
      %855 = vmatpush1.msra.mxu0 0.0
      %856 = vmatprep.subr.mxu0 0.0
      %857 = vmatpush1.msra.mxu0 0.0
      %858 = vmatprep.subr.mxu0 0.0
      %859 = vmatpush1.msra.mxu0 0.0
      %860 = vmatprep.subr.mxu0 0.0
      %861 = vmatpush1.msra.mxu0 0.0
      %862 = vmatprep.subr.mxu0 0.0
      %863 = vmatpush1.msra.mxu0 0.0
      %864 = vmatprep.subr.mxu0 0.0
      %865 = vmatpush1.msra.mxu0 0.0
      %866 = vmatprep.subr.mxu0 0.0
      %867 = vmatpush1.msra.mxu0 0.0
      %868 = vmatprep.subr.mxu0 0.0
      %869 = vmatpush1.msra.mxu0 0.0
      %870 = vmatprep.mubr.f32.mxu0 0.0
      %871 = vmatmul.mubr.f32.gmra.mrb[0].mxu0 %v694
      %v872 = vpop.f32.mrb[0].mxu0
      %v873 = vadd.f32 %v798, %v872
      %v874 = vpop.f32.mrb[0].mxu0
      %875 = vmatprep.mubr.f32.mxu0 0.0
      %876 = vmatmul.mubr.f32.gmra.mrb[0].mxu0 %v695
      %v877 = vpop.f32.mrb[0].mxu0
      %v878 = vadd.f32 %v803, %v877
      %v879 = vpop.f32.mrb[0].mxu0
      %880 = vdwg.mxu0
      %v881 = vld [vmem:[#allocation2 + $0x2] sm:$0xff]
      %v882 = vld [vmem:[#allocation2 + $0xa] sm:$0xff]
      %s883 = scalar_lea.vmem %s4, 256
      %v884 = vld [vmem:[%s883] sm:$0xff]
      %v885 = vld [vmem:[%s883 + $0x8] sm:$0xff]
      %v886 = vld [vmem:[%s883 + $0x10] sm:$0xff]
      %v887 = vld [vmem:[%s883 + $0x18] sm:$0xff]
      %v888 = vld [vmem:[%s883 + $0x20] sm:$0xff]
      %v889 = vld [vmem:[%s883 + $0x28] sm:$0xff]
      %v890 = vld [vmem:[%s883 + $0x30] sm:$0xff]
      %v891 = vld [vmem:[%s883 + $0x38] sm:$0xff]
      %v892 = vld [vmem:[%s883 + $0x40] sm:$0xff]
      %v893 = vld [vmem:[%s883 + $0x48] sm:$0xff]
      %v894 = vld [vmem:[%s883 + $0x50] sm:$0xff]
      %v895 = vld [vmem:[%s883 + $0x58] sm:$0xff]
      %v896 = vld [vmem:[%s883 + $0x60] sm:$0xff]
      %v897 = vld [vmem:[%s883 + $0x68] sm:$0xff]
      %v898 = vld [vmem:[%s883 + $0x70] sm:$0xff]
      %v899 = vld [vmem:[%s883 + $0x78] sm:$0xff]
      %900 = vmatprep.subr.mxu0 0.0
      %901 = vmatpush1.msra.mxu0 %v884
      %902 = vmatprep.subr.mxu0 0.0
      %903 = vmatpush1.msra.mxu0 %v885
      %904 = vmatprep.subr.mxu0 0.0
      %905 = vmatpush1.msra.mxu0 %v886
      %906 = vmatprep.subr.mxu0 0.0
      %907 = vmatpush1.msra.mxu0 %v887
      %908 = vmatprep.subr.mxu0 0.0
      %909 = vmatpush1.msra.mxu0 %v888
      %910 = vmatprep.subr.mxu0 0.0
      %911 = vmatpush1.msra.mxu0 %v889
      %912 = vmatprep.subr.mxu0 0.0
      %913 = vmatpush1.msra.mxu0 %v890
      %914 = vmatprep.subr.mxu0 0.0
      %915 = vmatpush1.msra.mxu0 %v891
      %916 = vmatprep.subr.mxu0 0.0
      %917 = vmatpush1.msra.mxu0 %v892
      %918 = vmatprep.subr.mxu0 0.0
      %919 = vmatpush1.msra.mxu0 %v893
      %920 = vmatprep.subr.mxu0 0.0
      %921 = vmatpush1.msra.mxu0 %v894
      %922 = vmatprep.subr.mxu0 0.0
      %923 = vmatpush1.msra.mxu0 %v895
      %924 = vmatprep.subr.mxu0 0.0
      %925 = vmatpush1.msra.mxu0 %v896
      %926 = vmatprep.subr.mxu0 0.0
      %927 = vmatpush1.msra.mxu0 %v897
      %928 = vmatprep.subr.mxu0 0.0
      %929 = vmatpush1.msra.mxu0 %v898
      %930 = vmatprep.subr.mxu0 0.0
      %931 = vmatpush1.msra.mxu0 %v899
      %932 = vmatprep.subr.mxu0 0.0
      %933 = vmatpush1.msra.mxu0 0.0
      %934 = vmatprep.subr.mxu0 0.0
      %935 = vmatpush1.msra.mxu0 0.0
      %936 = vmatprep.subr.mxu0 0.0
      %937 = vmatpush1.msra.mxu0 0.0
      %938 = vmatprep.subr.mxu0 0.0
      %939 = vmatpush1.msra.mxu0 0.0
      %940 = vmatprep.subr.mxu0 0.0
      %941 = vmatpush1.msra.mxu0 0.0
      %942 = vmatprep.subr.mxu0 0.0
      %943 = vmatpush1.msra.mxu0 0.0
      %944 = vmatprep.subr.mxu0 0.0
      %945 = vmatpush1.msra.mxu0 0.0
      %946 = vmatprep.subr.mxu0 0.0
      %947 = vmatpush1.msra.mxu0 0.0
      %948 = vmatprep.subr.mxu0 0.0
      %949 = vmatpush1.msra.mxu0 0.0
      %950 = vmatprep.subr.mxu0 0.0
      %951 = vmatpush1.msra.mxu0 0.0
      %952 = vmatprep.subr.mxu0 0.0
      %953 = vmatpush1.msra.mxu0 0.0
      %954 = vmatprep.subr.mxu0 0.0
      %955 = vmatpush1.msra.mxu0 0.0
      %956 = vmatprep.subr.mxu0 0.0
      %957 = vmatpush1.msra.mxu0 0.0
      %958 = vmatprep.subr.mxu0 0.0
      %959 = vmatpush1.msra.mxu0 0.0
      %960 = vmatprep.subr.mxu0 0.0
      %961 = vmatpush1.msra.mxu0 0.0
      %962 = vmatprep.subr.mxu0 0.0
      %963 = vmatpush1.msra.mxu0 0.0
      %964 = vmatprep.mubr.f32.mxu0 0.0
      %965 = vmatmul.mubr.f32.gmra.mrb[0].mxu0 %v881
      %v966 = vpop.f32.mrb[0].mxu0
      %v967 = vadd.f32 0.0, %v966
      %v968 = vpop.f32.mrb[0].mxu0
      %969 = vmatprep.mubr.f32.mxu0 0.0
      %970 = vmatmul.mubr.f32.gmra.mrb[0].mxu0 %v882
      %v971 = vpop.f32.mrb[0].mxu0
      %v972 = vadd.f32 0.0, %v971
      %v973 = vpop.f32.mrb[0].mxu0
      %974 = vdwg.mxu0
      %v975 = vadd.f32 %v873, %v967
      %v976 = vadd.f32 %v878, %v972
      %v977 = vld [vmem:[%s5] sm:$0x1]
      %v979 = vlaneseq
      %v980 = vshrl.u32 %v979, 7
      %v981 = vsub.s32 0, %v980
      %v982 = vrot.slane %v977, %v981
      %v984 = vmul.f32 %v975, %v982
      %v985 = vmul.f32 %v976, %v982
      %v986 = vld [vmem:[%s6] sm:$0x1]
      %v988 = vlaneseq
      %v989 = vshrl.u32 %v988, 7
      %v990 = vsub.s32 0, %v989
      %v991 = vrot.slane %v986, %v990
      %v993 = vadd.f32 %v984, %v991
      %v994 = vadd.f32 %v985, %v991
      %vm995 = vcmp.gt.f32.partialorder %v993, 0.0
      %vm996 = vcmp.gt.f32.partialorder %v994, 0.0
      %v997 = vmul.f32 %v993, 1.442695
      %v998 = vpow.pop %v997
      %v999 = vmul.f32 %v994, 1.442695
      %v1000 = vpow.pop %v999
      %v1001 = vsub.f32 %v998, 1.0
      %v1002 = vsub.f32 %v1000, 1.0
      %v1003 = vsel %vm995, %v993, %v1001
      %v1004 = vsel %vm996, %v994, %v1002
      %1005 = vst [vmem:[#allocation3] sm:$0x1] 0.0
      %1006 = vst [vmem:[#allocation3 + $0x11] sm:$0x1] 0.0
      %1007 = vst [vmem:[#allocation3 + $0x1] sm:$0xff] %v1003
      %1008 = vst [vmem:[#allocation3 + $0x9] sm:$0xff] %v1004
      %v1009 = vld [vmem:[#allocation3] sm:$0xff]
      %v1010 = vld [vmem:[#allocation3 + $0x8] sm:$0xff]
      %v1011 = vld [vmem:[%s7] sm:$0xff]
      %v1012 = vld [vmem:[%s7 + $0x8] sm:$0xff]
      %v1013 = vld [vmem:[%s7 + $0x10] sm:$0xff]
      %v1014 = vld [vmem:[%s7 + $0x18] sm:$0xff]
      %v1015 = vld [vmem:[%s7 + $0x20] sm:$0xff]
      %v1016 = vld [vmem:[%s7 + $0x28] sm:$0xff]
      %v1017 = vld [vmem:[%s7 + $0x30] sm:$0xff]
      %v1018 = vld [vmem:[%s7 + $0x38] sm:$0xff]
      %v1019 = vld [vmem:[%s7 + $0x40] sm:$0xff]
      %v1020 = vld [vmem:[%s7 + $0x48] sm:$0xff]
      %v1021 = vld [vmem:[%s7 + $0x50] sm:$0xff]
      %v1022 = vld [vmem:[%s7 + $0x58] sm:$0xff]
      %v1023 = vld [vmem:[%s7 + $0x60] sm:$0xff]
      %v1024 = vld [vmem:[%s7 + $0x68] sm:$0xff]
      %v1025 = vld [vmem:[%s7 + $0x70] sm:$0xff]
      %v1026 = vld [vmem:[%s7 + $0x78] sm:$0xff]
      %v1027 = vld [vmem:[#allocation3 + $0x1] sm:$0xff]
      %v1028 = vld [vmem:[#allocation3 + $0x9] sm:$0xff]
      %s1029 = scalar_lea.vmem %s7, 128
      %v1030 = vld [vmem:[%s1029] sm:$0xff]
      %v1031 = vld [vmem:[%s1029 + $0x8] sm:$0xff]
      %v1032 = vld [vmem:[%s1029 + $0x10] sm:$0xff]
      %v1033 = vld [vmem:[%s1029 + $0x18] sm:$0xff]
      %v1034 = vld [vmem:[%s1029 + $0x20] sm:$0xff]
      %v1035 = vld [vmem:[%s1029 + $0x28] sm:$0xff]
      %v1036 = vld [vmem:[%s1029 + $0x30] sm:$0xff]
      %v1037 = vld [vmem:[%s1029 + $0x38] sm:$0xff]
      %v1038 = vld [vmem:[%s1029 + $0x40] sm:$0xff]
      %v1039 = vld [vmem:[%s1029 + $0x48] sm:$0xff]
      %v1040 = vld [vmem:[%s1029 + $0x50] sm:$0xff]
      %v1041 = vld [vmem:[%s1029 + $0x58] sm:$0xff]
      %v1042 = vld [vmem:[%s1029 + $0x60] sm:$0xff]
      %v1043 = vld [vmem:[%s1029 + $0x68] sm:$0xff]
      %v1044 = vld [vmem:[%s1029 + $0x70] sm:$0xff]
      %v1045 = vld [vmem:[%s1029 + $0x78] sm:$0xff]
      %1046 = vmatprep.subr.mxu0 0.0
      %1047 = vmatpush1.msra.mxu0 %v1030
      %1048 = vmatprep.subr.mxu0 0.0
      %1049 = vmatpush1.msra.mxu0 %v1031
      %1050 = vmatprep.subr.mxu0 0.0
      %1051 = vmatpush1.msra.mxu0 %v1032
      %1052 = vmatprep.subr.mxu0 0.0
      %1053 = vmatpush1.msra.mxu0 %v1033
      %1054 = vmatprep.subr.mxu0 0.0
      %1055 = vmatpush1.msra.mxu0 %v1034
      %1056 = vmatprep.subr.mxu0 0.0
      %1057 = vmatpush1.msra.mxu0 %v1035
      %1058 = vmatprep.subr.mxu0 0.0
      %1059 = vmatpush1.msra.mxu0 %v1036
      %1060 = vmatprep.subr.mxu0 0.0
      %1061 = vmatpush1.msra.mxu0 %v1037
      %1062 = vmatprep.subr.mxu0 0.0
      %1063 = vmatpush1.msra.mxu0 %v1038
      %1064 = vmatprep.subr.mxu0 0.0
      %1065 = vmatpush1.msra.mxu0 %v1039
      %1066 = vmatprep.subr.mxu0 0.0
      %1067 = vmatpush1.msra.mxu0 %v1040
      %1068 = vmatprep.subr.mxu0 0.0
      %1069 = vmatpush1.msra.mxu0 %v1041
      %1070 = vmatprep.subr.mxu0 0.0
      %1071 = vmatpush1.msra.mxu0 %v1042
      %1072 = vmatprep.subr.mxu0 0.0
      %1073 = vmatpush1.msra.mxu0 %v1043
      %1074 = vmatprep.subr.mxu0 0.0
      %1075 = vmatpush1.msra.mxu0 %v1044
      %1076 = vmatprep.subr.mxu0 0.0
      %1077 = vmatpush1.msra.mxu0 %v1045
      %1078 = vmatprep.subr.mxu0 0.0
      %1079 = vmatpush1.msra.mxu0 0.0
      %1080 = vmatprep.subr.mxu0 0.0
      %1081 = vmatpush1.msra.mxu0 0.0
      %1082 = vmatprep.subr.mxu0 0.0
      %1083 = vmatpush1.msra.mxu0 0.0
      %1084 = vmatprep.subr.mxu0 0.0
      %1085 = vmatpush1.msra.mxu0 0.0
      %1086 = vmatprep.subr.mxu0 0.0
      %1087 = vmatpush1.msra.mxu0 0.0
      %1088 = vmatprep.subr.mxu0 0.0
      %1089 = vmatpush1.msra.mxu0 0.0
      %1090 = vmatprep.subr.mxu0 0.0
      %1091 = vmatpush1.msra.mxu0 0.0
      %1092 = vmatprep.subr.mxu0 0.0
      %1093 = vmatpush1.msra.mxu0 0.0
      %1094 = vmatprep.subr.mxu0 0.0
      %1095 = vmatpush1.msra.mxu0 0.0
      %1096 = vmatprep.subr.mxu0 0.0
      %1097 = vmatpush1.msra.mxu0 0.0
      %1098 = vmatprep.subr.mxu0 0.0
      %1099 = vmatpush1.msra.mxu0 0.0
      %1100 = vmatprep.subr.mxu0 0.0
      %1101 = vmatpush1.msra.mxu0 0.0
      %1102 = vmatprep.subr.mxu0 0.0
      %1103 = vmatpush1.msra.mxu0 0.0
      %1104 = vmatprep.subr.mxu0 0.0
      %1105 = vmatpush1.msra.mxu0 0.0
      %1106 = vmatprep.subr.mxu0 0.0
      %1107 = vmatpush1.msra.mxu0 0.0
      %1108 = vmatprep.subr.mxu0 0.0
      %1109 = vmatpush1.msra.mxu0 0.0
      %1110 = vmatprep.mubr.f32.mxu0 0.0
      %1111 = vmatmul.mubr.f32.gmra.mrb[0].mxu0 %v1027
      %v1112 = vpop.f32.mrb[0].mxu0
      %v1113 = vadd.f32 0.0, %v1112
      %v1114 = vpop.f32.mrb[0].mxu0
      %1115 = vmatprep.mubr.f32.mxu0 0.0
      %1116 = vmatmul.mubr.f32.gmra.mrb[0].mxu0 %v1028
      %v1117 = vpop.f32.mrb[0].mxu0
      %v1118 = vadd.f32 0.0, %v1117
      %v1119 = vpop.f32.mrb[0].mxu0
      %1120 = vdwg.mxu0
      %1121 = vmatprep.subr.mxu0 0.0
      %1122 = vmatpush1.msra.mxu0 %v1011
      %1123 = vmatprep.subr.mxu0 0.0
      %1124 = vmatpush1.msra.mxu0 %v1012
      %1125 = vmatprep.subr.mxu0 0.0
      %1126 = vmatpush1.msra.mxu0 %v1013
      %1127 = vmatprep.subr.mxu0 0.0
      %1128 = vmatpush1.msra.mxu0 %v1014
      %1129 = vmatprep.subr.mxu0 0.0
      %1130 = vmatpush1.msra.mxu0 %v1015
      %1131 = vmatprep.subr.mxu0 0.0
      %1132 = vmatpush1.msra.mxu0 %v1016
      %1133 = vmatprep.subr.mxu0 0.0
      %1134 = vmatpush1.msra.mxu0 %v1017
      %1135 = vmatprep.subr.mxu0 0.0
      %1136 = vmatpush1.msra.mxu0 %v1018
      %1137 = vmatprep.subr.mxu0 0.0
      %1138 = vmatpush1.msra.mxu0 %v1019
      %1139 = vmatprep.subr.mxu0 0.0
      %1140 = vmatpush1.msra.mxu0 %v1020
      %1141 = vmatprep.subr.mxu0 0.0
      %1142 = vmatpush1.msra.mxu0 %v1021
      %1143 = vmatprep.subr.mxu0 0.0
      %1144 = vmatpush1.msra.mxu0 %v1022
      %1145 = vmatprep.subr.mxu0 0.0
      %1146 = vmatpush1.msra.mxu0 %v1023
      %1147 = vmatprep.subr.mxu0 0.0
      %1148 = vmatpush1.msra.mxu0 %v1024
      %1149 = vmatprep.subr.mxu0 0.0
      %1150 = vmatpush1.msra.mxu0 %v1025
      %1151 = vmatprep.subr.mxu0 0.0
      %1152 = vmatpush1.msra.mxu0 %v1026
      %1153 = vmatprep.subr.mxu0 0.0
      %1154 = vmatpush1.msra.mxu0 0.0
      %1155 = vmatprep.subr.mxu0 0.0
      %1156 = vmatpush1.msra.mxu0 0.0
      %1157 = vmatprep.subr.mxu0 0.0
      %1158 = vmatpush1.msra.mxu0 0.0
      %1159 = vmatprep.subr.mxu0 0.0
      %1160 = vmatpush1.msra.mxu0 0.0
      %1161 = vmatprep.subr.mxu0 0.0
      %1162 = vmatpush1.msra.mxu0 0.0
      %1163 = vmatprep.subr.mxu0 0.0
      %1164 = vmatpush1.msra.mxu0 0.0
      %1165 = vmatprep.subr.mxu0 0.0
      %1166 = vmatpush1.msra.mxu0 0.0
      %1167 = vmatprep.subr.mxu0 0.0
      %1168 = vmatpush1.msra.mxu0 0.0
      %1169 = vmatprep.subr.mxu0 0.0
      %1170 = vmatpush1.msra.mxu0 0.0
      %1171 = vmatprep.subr.mxu0 0.0
      %1172 = vmatpush1.msra.mxu0 0.0
      %1173 = vmatprep.subr.mxu0 0.0
      %1174 = vmatpush1.msra.mxu0 0.0
      %1175 = vmatprep.subr.mxu0 0.0
      %1176 = vmatpush1.msra.mxu0 0.0
      %1177 = vmatprep.subr.mxu0 0.0
      %1178 = vmatpush1.msra.mxu0 0.0
      %1179 = vmatprep.subr.mxu0 0.0
      %1180 = vmatpush1.msra.mxu0 0.0
      %1181 = vmatprep.subr.mxu0 0.0
      %1182 = vmatpush1.msra.mxu0 0.0
      %1183 = vmatprep.subr.mxu0 0.0
      %1184 = vmatpush1.msra.mxu0 0.0
      %1185 = vmatprep.mubr.f32.mxu0 0.0
      %1186 = vmatmul.mubr.f32.gmra.mrb[0].mxu0 %v1009
      %v1187 = vpop.f32.mrb[0].mxu0
      %v1188 = vadd.f32 %v1113, %v1187
      %v1189 = vpop.f32.mrb[0].mxu0
      %1190 = vmatprep.mubr.f32.mxu0 0.0
      %1191 = vmatmul.mubr.f32.gmra.mrb[0].mxu0 %v1010
      %v1192 = vpop.f32.mrb[0].mxu0
      %v1193 = vadd.f32 %v1118, %v1192
      %v1194 = vpop.f32.mrb[0].mxu0
      %1195 = vdwg.mxu0
      %v1196 = vld [vmem:[#allocation3 + $0x2] sm:$0xff]
      %v1197 = vld [vmem:[#allocation3 + $0xa] sm:$0xff]
      %s1198 = scalar_lea.vmem %s7, 256
      %v1199 = vld [vmem:[%s1198] sm:$0xff]
      %v1200 = vld [vmem:[%s1198 + $0x8] sm:$0xff]
      %v1201 = vld [vmem:[%s1198 + $0x10] sm:$0xff]
      %v1202 = vld [vmem:[%s1198 + $0x18] sm:$0xff]
      %v1203 = vld [vmem:[%s1198 + $0x20] sm:$0xff]
      %v1204 = vld [vmem:[%s1198 + $0x28] sm:$0xff]
      %v1205 = vld [vmem:[%s1198 + $0x30] sm:$0xff]
      %v1206 = vld [vmem:[%s1198 + $0x38] sm:$0xff]
      %v1207 = vld [vmem:[%s1198 + $0x40] sm:$0xff]
      %v1208 = vld [vmem:[%s1198 + $0x48] sm:$0xff]
      %v1209 = vld [vmem:[%s1198 + $0x50] sm:$0xff]
      %v1210 = vld [vmem:[%s1198 + $0x58] sm:$0xff]
      %v1211 = vld [vmem:[%s1198 + $0x60] sm:$0xff]
      %v1212 = vld [vmem:[%s1198 + $0x68] sm:$0xff]
      %v1213 = vld [vmem:[%s1198 + $0x70] sm:$0xff]
      %v1214 = vld [vmem:[%s1198 + $0x78] sm:$0xff]
      %1215 = vmatprep.subr.mxu0 0.0
      %1216 = vmatpush1.msra.mxu0 %v1199
      %1217 = vmatprep.subr.mxu0 0.0
      %1218 = vmatpush1.msra.mxu0 %v1200
      %1219 = vmatprep.subr.mxu0 0.0
      %1220 = vmatpush1.msra.mxu0 %v1201
      %1221 = vmatprep.subr.mxu0 0.0
      %1222 = vmatpush1.msra.mxu0 %v1202
      %1223 = vmatprep.subr.mxu0 0.0
      %1224 = vmatpush1.msra.mxu0 %v1203
      %1225 = vmatprep.subr.mxu0 0.0
      %1226 = vmatpush1.msra.mxu0 %v1204
      %1227 = vmatprep.subr.mxu0 0.0
      %1228 = vmatpush1.msra.mxu0 %v1205
      %1229 = vmatprep.subr.mxu0 0.0
      %1230 = vmatpush1.msra.mxu0 %v1206
      %1231 = vmatprep.subr.mxu0 0.0
      %1232 = vmatpush1.msra.mxu0 %v1207
      %1233 = vmatprep.subr.mxu0 0.0
      %1234 = vmatpush1.msra.mxu0 %v1208
      %1235 = vmatprep.subr.mxu0 0.0
      %1236 = vmatpush1.msra.mxu0 %v1209
      %1237 = vmatprep.subr.mxu0 0.0
      %1238 = vmatpush1.msra.mxu0 %v1210
      %1239 = vmatprep.subr.mxu0 0.0
      %1240 = vmatpush1.msra.mxu0 %v1211
      %1241 = vmatprep.subr.mxu0 0.0
      %1242 = vmatpush1.msra.mxu0 %v1212
      %1243 = vmatprep.subr.mxu0 0.0
      %1244 = vmatpush1.msra.mxu0 %v1213
      %1245 = vmatprep.subr.mxu0 0.0
      %1246 = vmatpush1.msra.mxu0 %v1214
      %1247 = vmatprep.subr.mxu0 0.0
      %1248 = vmatpush1.msra.mxu0 0.0
      %1249 = vmatprep.subr.mxu0 0.0
      %1250 = vmatpush1.msra.mxu0 0.0
      %1251 = vmatprep.subr.mxu0 0.0
      %1252 = vmatpush1.msra.mxu0 0.0
      %1253 = vmatprep.subr.mxu0 0.0
      %1254 = vmatpush1.msra.mxu0 0.0
      %1255 = vmatprep.subr.mxu0 0.0
      %1256 = vmatpush1.msra.mxu0 0.0
      %1257 = vmatprep.subr.mxu0 0.0
      %1258 = vmatpush1.msra.mxu0 0.0
      %1259 = vmatprep.subr.mxu0 0.0
      %1260 = vmatpush1.msra.mxu0 0.0
      %1261 = vmatprep.subr.mxu0 0.0
      %1262 = vmatpush1.msra.mxu0 0.0
      %1263 = vmatprep.subr.mxu0 0.0
      %1264 = vmatpush1.msra.mxu0 0.0
      %1265 = vmatprep.subr.mxu0 0.0
      %1266 = vmatpush1.msra.mxu0 0.0
      %1267 = vmatprep.subr.mxu0 0.0
      %1268 = vmatpush1.msra.mxu0 0.0
      %1269 = vmatprep.subr.mxu0 0.0
      %1270 = vmatpush1.msra.mxu0 0.0
      %1271 = vmatprep.subr.mxu0 0.0
      %1272 = vmatpush1.msra.mxu0 0.0
      %1273 = vmatprep.subr.mxu0 0.0
      %1274 = vmatpush1.msra.mxu0 0.0
      %1275 = vmatprep.subr.mxu0 0.0
      %1276 = vmatpush1.msra.mxu0 0.0
      %1277 = vmatprep.subr.mxu0 0.0
      %1278 = vmatpush1.msra.mxu0 0.0
      %1279 = vmatprep.mubr.f32.mxu0 0.0
      %1280 = vmatmul.mubr.f32.gmra.mrb[0].mxu0 %v1196
      %v1281 = vpop.f32.mrb[0].mxu0
      %v1282 = vadd.f32 0.0, %v1281
      %v1283 = vpop.f32.mrb[0].mxu0
      %1284 = vmatprep.mubr.f32.mxu0 0.0
      %1285 = vmatmul.mubr.f32.gmra.mrb[0].mxu0 %v1197
      %v1286 = vpop.f32.mrb[0].mxu0
      %v1287 = vadd.f32 0.0, %v1286
      %v1288 = vpop.f32.mrb[0].mxu0
      %1289 = vdwg.mxu0
      %v1290 = vadd.f32 %v1188, %v1282
      %v1291 = vadd.f32 %v1193, %v1287
      %v1292 = vld [vmem:[%s8] sm:$0x1]
      %v1294 = vlaneseq
      %v1295 = vshrl.u32 %v1294, 7
      %v1296 = vsub.s32 0, %v1295
      %v1297 = vrot.slane %v1292, %v1296
      %v1299 = vmul.f32 %v1290, %v1297
      %v1300 = vmul.f32 %v1291, %v1297
      %v1301 = vld [vmem:[%s9] sm:$0x1]
      %v1303 = vlaneseq
      %v1304 = vshrl.u32 %v1303, 7
      %v1305 = vsub.s32 0, %v1304
      %v1306 = vrot.slane %v1301, %v1305
      %v1308 = vadd.f32 %v1299, %v1306
      %v1309 = vadd.f32 %v1300, %v1306
      %vm1310 = vcmp.gt.f32.partialorder %v1308, 0.0
      %vm1311 = vcmp.gt.f32.partialorder %v1309, 0.0
      %v1312 = vmul.f32 %v1308, 1.442695
      %v1313 = vpow.pop %v1312
      %v1314 = vmul.f32 %v1309, 1.442695
      %v1315 = vpow.pop %v1314
      %v1316 = vsub.f32 %v1313, 1.0
      %v1317 = vsub.f32 %v1315, 1.0
      %v1318 = vsel %vm1310, %v1308, %v1316
      %v1319 = vsel %vm1311, %v1309, %v1317
      %1320 = vst [vmem:[%s376] sm:$0xff] %v1318
      %1321 = vst [vmem:[%s376 + $0x8] sm:$0xff] %v1319
      %p1322 = scmp.lt.s32.totalorder %s21, 1
      %s1323 = scalar_select %p1322, %s21, 1
      %s1324 = smul.addr %s1323, 2
      %s1325 = smul.addr %s1324, 8
      %s1326 = scalar_lea.vmem %s10, %s1325
      // Predicated region
      $region61: #{upsampling_layer_forward.1} parent=59 // pred_check
        %p1327 = pneg %p259
      $region62: #{upsampling_layer_forward.1} parent=59 // pred_check_branch
        %1329 = sbr.rel (%p1327) target = $region64
      $region63: #{upsampling_layer_forward.1} parent=59 // pred_region
        _
      $region64: #{upsampling_layer_forward.1} parent=59 // pred_fallthru
        _
    $region60: #{upsampling_layer_forward.1} parent=5 // pred_fallthru
      _
    %p1330 = scmp.le.s32.totalorder 2, %s16
    // Predicated region
    $region65: #{upsampling_layer_forward.1} parent=5 // pred_check
      %p1331 = pneg %p1330
    $region66: #{upsampling_layer_forward.1} parent=5 // pred_check_branch
      %1333 = sbr.rel (%p1331) target = $region68
    $region67: #{upsampling_layer_forward.1} parent=5 // pred_region
      %s1334 = ssub.s32 %s16, 2
      // Predicated region
      $region69: #{upsampling_layer_forward.1} parent=67 // pred_check
        %p1335 = pneg %p265
      $region70: #{upsampling_layer_forward.1} parent=67 // pred_check_branch
        %1337 = sbr.rel (%p1335) target = $region72
      $region71: #{upsampling_layer_forward.1} parent=67 // pred_region
        %p1338 = scmp.lt.s32.totalorder %s22, 1
        %s1339 = scalar_select %p1338, %s22, 1
        %s1340 = smul.addr %s1339, 2
        %s1341 = smul.addr %s1340, 8
        %s1342 = scalar_lea.vmem %s10, %s1341
      $region72: #{upsampling_layer_forward.1} parent=67 // pred_fallthru
        _
    $region68: #{upsampling_layer_forward.1} parent=5 // pred_fallthru
      _
  $region6: #{upsampling_layer_forward.1} parent=0 // loop_footer
    %s20 = sadd.s32 1, %s16
  $region7: #{upsampling_layer_forward.1} parent=0 // loop_footer_branch
    %15 = sbr.rel target = $region3
  $region8: #{upsampling_layer_forward.1} parent=0 // loop_exit
    _

</llo_original>
